<compile_context>
chip_gen: v6e
topology: v6e:2x2x1
jax: 0.10.0
libtpu: 0.0.40
codegen_flags: <defaults>
</compile_context>

<pallas_src>
import functools

import jax
import jax.numpy as jnp
from jax.experimental import pallas as pl
from jax.experimental.pallas import tpu as pltpu

_EPS = 1e-5
_VMEM_LIMIT = 32 * 1024 * 1024


def _round_up(x, m):
    return (x + m - 1) // m * m


def _pick_tile(dim, candidates):
    """Largest candidate tile (multiple of 128) dividing round_up(dim, 128)."""
    d = _round_up(dim, 128)
    for t in candidates:
        if d % t == 0:
            return t, d
    return 128, d


def _spec(shape):
    n = len(shape)
    return pl.BlockSpec(shape, lambda i, n=n: (0,) * n)


# ----------------------------- Pallas kernels -----------------------------

def _matmul_stats_kernel(x_ref, w_ref, o_ref, sum_ref, sq_ref, acc_ref):
    """Tiled MXU matmul (f32 accumulation). On the last K step, also emits 8-row
    per-channel partial sums / sums-of-squares (fused BatchNorm statistics)."""
    @pl.when(pl.program_id(2) == 0)
    def _():
        acc_ref[...] = jnp.zeros_like(acc_ref)

    acc_ref[...] += jnp.dot(x_ref[...], w_ref[...],
                            preferred_element_type=jnp.float32)

    @pl.when(pl.program_id(2) == pl.num_programs(2) - 1)
    def _():
        acc = acc_ref[...]
        o_ref[...] = acc.astype(o_ref.dtype)
        acc2 = acc * acc
        ps = acc[0:8, :]
        ps2 = acc2[0:8, :]
        for r in range(8, acc.shape[0], 8):      # static unroll; cheap VPU adds
            ps = ps + acc[r:r + 8, :]
            ps2 = ps2 + acc2[r:r + 8, :]
        sum_ref[...] = ps
        sq_ref[...] = ps2


def _bn_scale_kernel(x_ref, s_ref, b_ref, o_ref):
    y = x_ref[...].astype(jnp.float32) * s_ref[...] + b_ref[...]
    o_ref[...] = y.astype(o_ref.dtype)


def _bn_scale_relu_kernel(x_ref, s_ref, b_ref, o_ref):
    y = x_ref[...].astype(jnp.float32) * s_ref[...] + b_ref[...]
    o_ref[...] = jnp.maximum(y, 0.0).astype(o_ref.dtype)


def _bn_scale_add_relu_kernel(x_ref, r_ref, s_ref, b_ref, o_ref):
    y = (x_ref[...].astype(jnp.float32) * s_ref[...] + b_ref[...]
         + r_ref[...].astype(jnp.float32))
    o_ref[...] = jnp.maximum(y, 0.0).astype(o_ref.dtype)


def _avgpool_kernel(x_ref, o_ref):
    o_ref[...] = jnp.mean(x_ref[...].astype(jnp.float32), axis=1)   # (N,HW,C)->(N,C)


def _head_kernel(x_ref, w_ref, b_ref, o_ref):
    logits = jnp.dot(x_ref[...], w_ref[...],
                     preferred_element_type=jnp.float32) + b_ref[...]
    m = jnp.max(logits, axis=-1, keepdims=True)
    s = logits - m
    o_ref[...] = s - jnp.log(jnp.sum(jnp.exp(s), axis=-1, keepdims=True))


# ----------------------------- Pallas wrappers -----------------------------

def _conv_matmul_stats(cols, w):
    """cols: (M, K) bf16, w: (K, N). Returns padded bf16 product (Mp, Np) plus
    per-row-tile channel partial sums / sums-of-squares (f32)."""
    M, K = cols.shape
    K2, N = w.shape
    assert K == K2
    tm = min(256, _round_up(M, 16))
    Mp = _round_up(M, tm)
    tn, Np = _pick_tile(N, (512, 256, 128))
    tk, Kp = _pick_tile(K, (1024, 768, 640, 512, 384, 256, 128))

    x = cols.astype(jnp.bfloat16)
    wq = w.astype(jnp.bfloat16)
    if (Mp, Kp) != (M, K):
        x = jnp.pad(x, ((0, Mp - M), (0, Kp - K)))
    if (Kp, Np) != (K, N):
        wq = jnp.pad(wq, ((0, Kp - K), (0, Np - N)))

    nmt = Mp // tm
    grid = (nmt, Np // tn, Kp // tk)
    y, psum, psq = pl.pallas_call(
        _matmul_stats_kernel,
        grid=grid,
        in_specs=[pl.BlockSpec((tm, tk), lambda i, j, k: (i, k)),
                  pl.BlockSpec((tk, tn), lambda i, j, k: (k, j))],
        out_specs=[pl.BlockSpec((tm, tn), lambda i, j, k: (i, j)),
                   pl.BlockSpec((8, tn), lambda i, j, k: (i, j)),
                   pl.BlockSpec((8, tn), lambda i, j, k: (i, j))],
        out_shape=[jax.ShapeDtypeStruct((Mp, Np), jnp.bfloat16),
                   jax.ShapeDtypeStruct((8 * nmt, Np), jnp.float32),
                   jax.ShapeDtypeStruct((8 * nmt, Np), jnp.float32)],
        scratch_shapes=[pltpu.VMEM((tm, tn), jnp.float32)],
        compiler_params=pltpu.CompilerParams(
            dimension_semantics=("parallel", "parallel", "arbitrary"),
            vmem_limit_bytes=_VMEM_LIMIT),
        cost_estimate=pl.CostEstimate(
            flops=2 * Mp * Np * Kp,
            transcendentals=0,
            bytes_accessed=2 * Mp * Kp * (Np // tn) + 2 * Kp * Np + 2 * Mp * Np),
    )(x, wq)
    return y, psum, psq, (M, N, Mp, Np)


def _scale_shift(psum, psq, gamma, beta, m_true):
    """Fold batch statistics into per-channel scale/shift (f32, shape (1, Np))."""
    np_ = psum.shape[-1]
    sums = jnp.sum(psum, axis=0)
    sqs = jnp.sum(psq, axis=0)
    mean = sums / m_true
    var = jnp.maximum(sqs / m_true - mean * mean, 0.0)   # clamp cancellation error
    if gamma.shape[0] != np_:                             # padded channels: gamma=1, beta=0
        gamma = jnp.pad(gamma, (0, np_ - gamma.shape[0]), constant_values=1.0)
        beta = jnp.pad(beta, (0, np_ - beta.shape[0]))
    scale = gamma * jax.lax.rsqrt(var + _EPS)
    shift = beta - mean * scale
    return scale.reshape(1, np_), shift.reshape(1, np_)


def _pick_bn_rows(mp, np_):
    budget = 2 * 1024 * 1024                 # bytes per (rows, Np) bf16 tile
    for rows in (4096, 2048, 1024, 512, 256, 128, 64, 32, 16):
        if mp % rows == 0 and rows * np_ * 2 <= budget:
            return rows
    return 16


def _bn_apply(y, scale, shift, *, relu):
    mp, np_ = y.shape
    rows = _pick_bn_rows(mp, np_)
    kernel = _bn_scale_relu_kernel if relu else _bn_scale_kernel
    return pl.pallas_call(
        kernel,
        grid=(mp // rows,),
        in_specs=[pl.BlockSpec((rows, np_), lambda i: (i, 0)),
                  pl.BlockSpec((1, np_), lambda i: (0, 0)),
                  pl.BlockSpec((1, np_), lambda i: (0, 0))],
        out_specs=pl.BlockSpec((rows, np_), lambda i: (i, 0)),
        out_shape=jax.ShapeDtypeStruct((mp, np_), jnp.bfloat16),
        compiler_params=pltpu.CompilerParams(
            dimension_semantics=("parallel",),
            vmem_limit_bytes=_VMEM_LIMIT),
    )(y, scale, shift)


def _bn_apply_add_relu(y, res, scale, shift):
    mp, np_ = y.shape
    rows = _pick_bn_rows(mp, np_)
    return pl.pallas_call(
        _bn_scale_add_relu_kernel,
        grid=(mp // rows,),
        in_specs=[pl.BlockSpec((rows, np_), lambda i: (i, 0)),
                  pl.BlockSpec((rows, np_), lambda i: (i, 0)),
                  pl.BlockSpec((1, np_), lambda i: (0, 0)),
                  pl.BlockSpec((1, np_), lambda i: (0, 0))],
        out_specs=pl.BlockSpec((rows, np_), lambda i: (i, 0)),
        out_shape=jax.ShapeDtypeStruct((mp, np_), jnp.bfloat16),
        compiler_params=pltpu.CompilerParams(
            dimension_semantics=("parallel",),
            vmem_limit_bytes=_VMEM_LIMIT),
    )(y, res, scale, shift)


# ----------------------------- glue (im2col, conv+BN stages) -----------------------------

def _im2col(x, *, stride, kh, kw, padding):
    """x: (N,H,W,Cin) -> bf16 cols (N*Ho*Wo, kh*kw*Cin)."""
    x = x.astype(jnp.bfloat16)
    n, h, w, c = x.shape
    if padding:
        x = jnp.pad(x, ((0, 0), (padding, padding), (padding, padding), (0, 0)))
    hp, wp = x.shape[1], x.shape[2]
    ho = (hp - kh) // stride + 1
    wo = (wp - kw) // stride + 1
    if kh == 1 and kw == 1:
        cols = x[:, 0:stride * ho:stride, 0:stride * wo:stride, :].reshape(n * ho * wo, c)
    else:
        # TODO(synk): replace explicit im2col with per-tap accumulating matmuls to avoid
        # the kh*kw activation expansion in HBM.
        pieces = [x[:, di:di + stride * ho:stride, dj:dj + stride * wo:stride, :]
                  for di in range(kh) for dj in range(kw)]
        cols = jnp.concatenate(pieces, axis=-1).reshape(n * ho * wo, kh * kw * c)
    return cols, n, ho, wo


@functools.partial(jax.jit, static_argnames=("stride", "k", "pad", "relu"))
def conv_bn_act(x, w_flat, gamma, beta, *, stride, k, pad, relu):
    cols, n, ho, wo = _im2col(x, stride=stride, kh=k, kw=k, padding=pad)
    y, psum, psq, (m, nc, mp, np_) = _conv_matmul_stats(cols, w_flat)
    scale, shift = _scale_shift(psum, psq, gamma, beta, float(m))
    out = _bn_apply(y, scale, shift, relu=relu)
    if (mp, np_) != (m, nc):
        out = out[:m, :nc]
    return out.reshape(n, ho, wo, nc)


@functools.partial(jax.jit, static_argnames=("stride", "k", "pad"))
def conv_bn_add_relu(x, residual, w_flat, gamma, beta, *, stride, k, pad):
    cols, n, ho, wo = _im2col(x, stride=stride, kh=k, kw=k, padding=pad)
    y, psum, psq, (m, nc, mp, np_) = _conv_matmul_stats(cols, w_flat)
    scale, shift = _scale_shift(psum, psq, gamma, beta, float(m))
    res = residual.reshape(m, nc).astype(jnp.bfloat16)
    if (mp, np_) != (m, nc):
        res = jnp.pad(res, ((0, mp - m), (0, np_ - nc)))
    out = _bn_apply_add_relu(y, res, scale, shift)
    if (mp, np_) != (m, nc):
        out = out[:m, :nc]
    return out.reshape(n, ho, wo, nc)


@jax.jit
def maxpool_3x3_s2_p1(x):
    # Pairwise max over the 9 shifted strided views; XLA fuses to one elementwise pass.
    n, h, w, c = x.shape
    xp = jnp.pad(x, ((0, 0), (1, 1), (1, 1), (0, 0)), constant_values=-jnp.inf)
    ho = (h + 2 - 3) // 2 + 1
    wo = (w + 2 - 3) // 2 + 1
    out = None
    for di in range(3):
        for dj in range(3):
            v = xp[:, di:di + 2 * ho:2, dj:dj + 2 * wo:2, :]
            out = v if out is None else jnp.maximum(out, v)
    return out


@jax.jit
def head_forward(x, fc_w, fc_b):
    n, h, w, c = x.shape
    feat = pl.pallas_call(
        _avgpool_kernel,
        grid=(1,),
        in_specs=[_spec((n, h * w, c))],
        out_specs=_spec((n, c)),
        out_shape=jax.ShapeDtypeStruct((n, c), jnp.float32),
        compiler_params=pltpu.CompilerParams(vmem_limit_bytes=_VMEM_LIMIT),
    )(x.reshape(n, h * w, c))
    k = fc_w.shape[1]
    return pl.pallas_call(
        _head_kernel,
        grid=(1,),
        in_specs=[_spec((n, c)), _spec((c, k)), _spec((1, k))],
        out_specs=_spec((n, k)),
        out_shape=jax.ShapeDtypeStruct((n, k), jnp.float32),
        compiler_params=pltpu.CompilerParams(vmem_limit_bytes=_VMEM_LIMIT),
    )(feat, fc_w, fc_b)


# ----------------------------- ResNet101 model -----------------------------

def _make_conv(key, cin, cout, k, stride, padding):
    fan_in = k * k * cin
    w = jax.random.normal(key, (k, k, cin, cout), jnp.float32) * (2.0 / fan_in) ** 0.5
    return {
        "w": w.reshape(k * k * cin, cout).astype(jnp.bfloat16),   # MXU-native storage
        "gamma": jnp.ones((cout,), jnp.float32),
        "beta": jnp.zeros((cout,), jnp.float32),
        "k": k, "stride": stride, "pad": padding,
    }


def _conv_bn(x, p, relu):
    return conv_bn_act(x, p["w"], p["gamma"], p["beta"],
                       stride=p["stride"], k=p["k"], pad=p["pad"], relu=relu)


def _bottleneck(x, blk):
    identity = x
    out = _conv_bn(x, blk["conv1"], relu=True)
    out = _conv_bn(out, blk["conv2"], relu=True)
    if "downsample" in blk:
        identity = _conv_bn(x, blk["downsample"], relu=False)
    p = blk["conv3"]
    return conv_bn_add_relu(out, identity, p["w"], p["gamma"], p["beta"],
                            stride=p["stride"], k=p["k"], pad=p["pad"])


def init_resnet101_params(key, n_classes=10):
    keys = iter(jax.random.split(key, 256))
    params = {"conv1": _make_conv(next(keys), 3, 64, 7, 2, 3)}
    layers = []
    inplanes = 64
    cfg = [(64, 3, 1), (128, 4, 2), (256, 23, 2), (512, 3, 2)]   # ResNet-101
    for planes, nblocks, stride in cfg:
        blocks = []
        for bi in range(nblocks):
            s = stride if bi == 0 else 1
            blk = {
                "conv1": _make_conv(next(keys), inplanes, planes, 1, 1, 0),
                "conv2": _make_conv(next(keys), planes, planes, 3, s, 1),
                "conv3": _make_conv(next(keys), planes, planes * 4, 1, 1, 0),
            }
            if bi == 0 and (s != 1 or inplanes != planes * 4):
                blk["downsample"] = _make_conv(next(keys), inplanes, planes * 4, 1, s, 0)
            blocks.append(blk)
            inplanes = planes * 4
        layers.append(blocks)
    params["layers"] = layers
    params["fc_w"] = jax.random.normal(next(keys), (512 * 4, n_classes), jnp.float32) \
        * (1.0 / (512 * 4)) ** 0.5
    params["fc_b"] = jnp.zeros((1, n_classes), jnp.float32)
    return params


def resnet101_forward(params, x_nchw):
    """x_nchw: (N, 3, H, W) float32 -> (N, n_classes) log-probabilities."""
    x = jnp.transpose(x_nchw.astype(jnp.float32), (0, 2, 3, 1))   # NCHW -> NHWC
    x = _conv_bn(x, params["conv1"], relu=True)                   # stem conv7x7/2 + BN + ReLU
    x = maxpool_3x3_s2_p1(x)                                      # maxpool 3x3/2
    for blocks in params["layers"]:
        for blk in blocks:
            x = _bottleneck(x, blk)
    return head_forward(x, params["fc_w"], params["fc_b"])        # avgpool + fc + log_softmax


if __name__ == "__main__":
    # Small deterministic example: batch=2, 3 channels, 32x32 image (spatial shrinks to 1x1).
    x = jax.random.normal(jax.random.PRNGKey(0), (2, 3, 32, 32), jnp.float32)
    params = init_resnet101_params(jax.random.PRNGKey(42), n_classes=10)

    out = resnet101_forward(params, x)
    out = jax.block_until_ready(out)

    assert out.shape == (2, 10), out.shape
    assert bool(jnp.all(jnp.isfinite(out)))
    # rows of log_softmax must (log-)sum to ~1
    assert bool(jnp.allclose(jnp.sum(jnp.exp(out), axis=1), 1.0, atol=1e-4))
    print("KERNEL_OK")
</pallas_src>

<mosaic_0001>
module attributes {stable_mosaic.version = 11 : i64} {
  func.func @_matmul_stats_kernel(%arg0: i32, %arg1: i32, %arg2: i32, %arg3: memref<256x256xbf16, #tpu.memory_space<vmem>>, %arg4: memref<256x128xbf16, #tpu.memory_space<vmem>>, %arg5: memref<256x128xbf16, #tpu.memory_space<vmem>>, %arg6: memref<8x128xf32, #tpu.memory_space<vmem>>, %arg7: memref<8x128xf32, #tpu.memory_space<vmem>>, %arg8: memref<256x128xf32, #tpu.memory_space<vmem>>) attributes {dimension_semantics = [#tpu.dimension_semantics<parallel>, #tpu.dimension_semantics<parallel>, #tpu.dimension_semantics<arbitrary>], iteration_bounds = array<i64: 2, 1, 1>, scalar_prefetch = 0 : i64, scratch_operands = 1 : i64, tpu.core_type = #tpu.core_type<tc>, window_params = [{transform_indices = @transform_0, window_bounds = array<i64: 256, 256>}, {transform_indices = @transform_1, window_bounds = array<i64: 256, 128>}, {transform_indices = @transform_2, window_bounds = array<i64: 256, 128>}, {transform_indices = @transform_3, window_bounds = array<i64: 8, 128>}, {transform_indices = @transform_4, window_bounds = array<i64: 8, 128>}]} {
    %c0_i32 = arith.constant 0 : i32
    %0 = arith.cmpi eq, %arg2, %c0_i32 : i32
    %1 = arith.extui %0 : i1 to i32
    %c0_i32_0 = arith.constant 0 : i32
    %2 = arith.cmpi ne, %1, %c0_i32_0 : i32
    scf.if %2 {
      %cst_10 = arith.constant 0.000000e+00 : f32
      %12 = vector.broadcast %cst_10 : f32 to vector<256x128xf32>
      %c0_11 = arith.constant 0 : index
      %c0_12 = arith.constant 0 : index
      %13 = vector.load %arg8[%c0_11, %c0_12] : memref<256x128xf32, #tpu.memory_space<vmem>>, vector<256x128xf32>
      tpu.vector_store %arg8[%c0_11, %c0_12], %12 {strides = array<i32>} : memref<256x128xf32, #tpu.memory_space<vmem>>, vector<256x128xf32>,
    } else {
    }
    %c0 = arith.constant 0 : index
    %c0_1 = arith.constant 0 : index
    %3 = vector.load %arg8[%c0, %c0_1] : memref<256x128xf32, #tpu.memory_space<vmem>>, vector<256x128xf32>
    %c0_2 = arith.constant 0 : index
    %c0_3 = arith.constant 0 : index
    %4 = vector.load %arg3[%c0_2, %c0_3] : memref<256x256xbf16, #tpu.memory_space<vmem>>, vector<256x256xbf16>
    %c0_4 = arith.constant 0 : index
    %c0_5 = arith.constant 0 : index
    %5 = vector.load %arg4[%c0_4, %c0_5] : memref<256x128xbf16, #tpu.memory_space<vmem>>, vector<256x128xbf16>
    %cst = arith.constant dense<0.000000e+00> : vector<256x128xf32>
    %6 = tpu.matmul %4, %5, %cst {dimension_numbers = #tpu.dot_dimension_numbers<[1], [0], [0], [1], [0, 0, 1, 1], [], []>} : vector<256x256xbf16>, vector<256x128xbf16>, vector<256x128xf32> -> vector<256x128xf32>
    %7 = arith.addf %3, %6 : vector<256x128xf32>
    %c0_6 = arith.constant 0 : index
    %c0_7 = arith.constant 0 : index
    %8 = vector.load %arg8[%c0_6, %c0_7] : memref<256x128xf32, #tpu.memory_space<vmem>>, vector<256x128xf32>
    tpu.vector_store %arg8[%c0_6, %c0_7], %7 {strides = array<i32>} : memref<256x128xf32, #tpu.memory_space<vmem>>, vector<256x128xf32>,
    %c0_i32_8 = arith.constant 0 : i32
    %9 = arith.cmpi eq, %arg2, %c0_i32_8 : i32
    %10 = arith.extui %9 : i1 to i32
    %c0_i32_9 = arith.constant 0 : i32
    %11 = arith.cmpi ne, %10, %c0_i32_9 : i32
    scf.if %11 {
      %c0_10 = arith.constant 0 : index
      %c0_11 = arith.constant 0 : index
      %12 = vector.load %arg8[%c0_10, %c0_11] : memref<256x128xf32, #tpu.memory_space<vmem>>, vector<256x128xf32>
      %13 = arith.truncf %12 : vector<256x128xf32> to vector<256x128xbf16>
      %c0_12 = arith.constant 0 : index
      %c0_13 = arith.constant 0 : index
      %14 = vector.load %arg5[%c0_12, %c0_13] : memref<256x128xbf16, #tpu.memory_space<vmem>>, vector<256x128xbf16>
      tpu.vector_store %arg5[%c0_12, %c0_13], %13 {strides = array<i32>} : memref<256x128xbf16, #tpu.memory_space<vmem>>, vector<256x128xbf16>,
      %15 = arith.mulf %12, %12 : vector<256x128xf32>
      %16 = vector.extract_strided_slice %12 {offsets = [0, 0], sizes = [8, 128], strides = [1, 1]} : vector<256x128xf32> to vector<8x128xf32>
      %17 = vector.extract_strided_slice %15 {offsets = [0, 0], sizes = [8, 128], strides = [1, 1]} : vector<256x128xf32> to vector<8x128xf32>
      %18 = vector.extract_strided_slice %12 {offsets = [8, 0], sizes = [8, 128], strides = [1, 1]} : vector<256x128xf32> to vector<8x128xf32>
      %19 = arith.addf %16, %18 : vector<8x128xf32>
      %20 = vector.extract_strided_slice %15 {offsets = [8, 0], sizes = [8, 128], strides = [1, 1]} : vector<256x128xf32> to vector<8x128xf32>
      %21 = arith.addf %17, %20 : vector<8x128xf32>
      %22 = vector.extract_strided_slice %12 {offsets = [16, 0], sizes = [8, 128], strides = [1, 1]} : vector<256x128xf32> to vector<8x128xf32>
      %23 = arith.addf %19, %22 : vector<8x128xf32>
      %24 = vector.extract_strided_slice %15 {offsets = [16, 0], sizes = [8, 128], strides = [1, 1]} : vector<256x128xf32> to vector<8x128xf32>
      %25 = arith.addf %21, %24 : vector<8x128xf32>
      %26 = vector.extract_strided_slice %12 {offsets = [24, 0], sizes = [8, 128], strides = [1, 1]} : vector<256x128xf32> to vector<8x128xf32>
      %27 = arith.addf %23, %26 : vector<8x128xf32>
      %28 = vector.extract_strided_slice %15 {offsets = [24, 0], sizes = [8, 128], strides = [1, 1]} : vector<256x128xf32> to vector<8x128xf32>
      %29 = arith.addf %25, %28 : vector<8x128xf32>
      %30 = vector.extract_strided_slice %12 {offsets = [32, 0], sizes = [8, 128], strides = [1, 1]} : vector<256x128xf32> to vector<8x128xf32>
      %31 = arith.addf %27, %30 : vector<8x128xf32>
      %32 = vector.extract_strided_slice %15 {offsets = [32, 0], sizes = [8, 128], strides = [1, 1]} : vector<256x128xf32> to vector<8x128xf32>
      %33 = arith.addf %29, %32 : vector<8x128xf32>
      %34 = vector.extract_strided_slice %12 {offsets = [40, 0], sizes = [8, 128], strides = [1, 1]} : vector<256x128xf32> to vector<8x128xf32>
      %35 = arith.addf %31, %34 : vector<8x128xf32>
      %36 = vector.extract_strided_slice %15 {offsets = [40, 0], sizes = [8, 128], strides = [1, 1]} : vector<256x128xf32> to vector<8x128xf32>
      %37 = arith.addf %33, %36 : vector<8x128xf32>
      %38 = vector.extract_strided_slice %12 {offsets = [48, 0], sizes = [8, 128], strides = [1, 1]} : vector<256x128xf32> to vector<8x128xf32>
      %39 = arith.addf %35, %38 : vector<8x128xf32>
      %40 = vector.extract_strided_slice %15 {offsets = [48, 0], sizes = [8, 128], strides = [1, 1]} : vector<256x128xf32> to vector<8x128xf32>
      %41 = arith.addf %37, %40 : vector<8x128xf32>
      %42 = vector.extract_strided_slice %12 {offsets = [56, 0], sizes = [8, 128], strides = [1, 1]} : vector<256x128xf32> to vector<8x128xf32>
      %43 = arith.addf %39, %42 : vector<8x128xf32>
      %44 = vector.extract_strided_slice %15 {offsets = [56, 0], sizes = [8, 128], strides = [1, 1]} : vector<256x128xf32> to vector<8x128xf32>
      %45 = arith.addf %41, %44 : vector<8x128xf32>
      %46 = vector.extract_strided_slice %12 {offsets = [64, 0], sizes = [8, 128], strides = [1, 1]} : vector<256x128xf32> to vector<8x128xf32>
      %47 = arith.addf %43, %46 : vector<8x128xf32>
      %48 = vector.extract_strided_slice %15 {offsets = [64, 0], sizes = [8, 128], strides = [1, 1]} : vector<256x128xf32> to vector<8x128xf32>
      %49 = arith.addf %45, %48 : vector<8x128xf32>
      %50 = vector.extract_strided_slice %12 {offsets = [72, 0], sizes = [8, 128], strides = [1, 1]} : vector<256x128xf32> to vector<8x128xf32>
      %51 = arith.addf %47, %50 : vector<8x128xf32>
      %52 = vector.extract_strided_slice %15 {offsets = [72, 0], sizes = [8, 128], strides = [1, 1]} : vector<256x128xf32> to vector<8x128xf32>
      %53 = arith.addf %49, %52 : vector<8x128xf32>
      %54 = vector.extract_strided_slice %12 {offsets = [80, 0], sizes = [8, 128], strides = [1, 1]} : vector<256x128xf32> to vector<8x128xf32>
      %55 = arith.addf %51, %54 : vector<8x128xf32>
      %56 = vector.extract_strided_slice %15 {offsets = [80, 0], sizes = [8, 128], strides = [1, 1]} : vector<256x128xf32> to vector<8x128xf32>
      %57 = arith.addf %53, %56 : vector<8x128xf32>
      %58 = vector.extract_strided_slice %12 {offsets = [88, 0], sizes = [8, 128], strides = [1, 1]} : vector<256x128xf32> to vector<8x128xf32>
      %59 = arith.addf %55, %58 : vector<8x128xf32>
      %60 = vector.extract_strided_slice %15 {offsets = [88, 0], sizes = [8, 128], strides = [1, 1]} : vector<256x128xf32> to vector<8x128xf32>
      %61 = arith.addf %57, %60 : vector<8x128xf32>
      %62 = vector.extract_strided_slice %12 {offsets = [96, 0], sizes = [8, 128], strides = [1, 1]} : vector<256x128xf32> to vector<8x128xf32>
      %63 = arith.addf %59, %62 : vector<8x128xf32>
      %64 = vector.extract_strided_slice %15 {offsets = [96, 0], sizes = [8, 128], strides = [1, 1]} : vector<256x128xf32> to vector<8x128xf32>
      %65 = arith.addf %61, %64 : vector<8x128xf32>
      %66 = vector.extract_strided_slice %12 {offsets = [104, 0], sizes = [8, 128], strides = [1, 1]} : vector<256x128xf32> to vector<8x128xf32>
      %67 = arith.addf %63, %66 : vector<8x128xf32>
      %68 = vector.extract_strided_slice %15 {offsets = [104, 0], sizes = [8, 128], strides = [1, 1]} : vector<256x128xf32> to vector<8x128xf32>
      %69 = arith.addf %65, %68 : vector<8x128xf32>
      %70 = vector.extract_strided_slice %12 {offsets = [112, 0], sizes = [8, 128], strides = [1, 1]} : vector<256x128xf32> to vector<8x128xf32>
      %71 = arith.addf %67, %70 : vector<8x128xf32>
      %72 = vector.extract_strided_slice %15 {offsets = [112, 0], sizes = [8, 128], strides = [1, 1]} : vector<256x128xf32> to vector<8x128xf32>
      %73 = arith.addf %69, %72 : vector<8x128xf32>
      %74 = vector.extract_strided_slice %12 {offsets = [120, 0], sizes = [8, 128], strides = [1, 1]} : vector<256x128xf32> to vector<8x128xf32>
      %75 = arith.addf %71, %74 : vector<8x128xf32>
      %76 = vector.extract_strided_slice %15 {offsets = [120, 0], sizes = [8, 128], strides = [1, 1]} : vector<256x128xf32> to vector<8x128xf32>
      %77 = arith.addf %73, %76 : vector<8x128xf32>
      %78 = vector.extract_strided_slice %12 {offsets = [128, 0], sizes = [8, 128], strides = [1, 1]} : vector<256x128xf32> to vector<8x128xf32>
      %79 = arith.addf %75, %78 : vector<8x128xf32>
      %80 = vector.extract_strided_slice %15 {offsets = [128, 0], sizes = [8, 128], strides = [1, 1]} : vector<256x128xf32> to vector<8x128xf32>
      %81 = arith.addf %77, %80 : vector<8x128xf32>
      %82 = vector.extract_strided_slice %12 {offsets = [136, 0], sizes = [8, 128], strides = [1, 1]} : vector<256x128xf32> to vector<8x128xf32>
      %83 = arith.addf %79, %82 : vector<8x128xf32>
      %84 = vector.extract_strided_slice %15 {offsets = [136, 0], sizes = [8, 128], strides = [1, 1]} : vector<256x128xf32> to vector<8x128xf32>
      %85 = arith.addf %81, %84 : vector<8x128xf32>
      %86 = vector.extract_strided_slice %12 {offsets = [144, 0], sizes = [8, 128], strides = [1, 1]} : vector<256x128xf32> to vector<8x128xf32>
      %87 = arith.addf %83, %86 : vector<8x128xf32>
      %88 = vector.extract_strided_slice %15 {offsets = [144, 0], sizes = [8, 128], strides = [1, 1]} : vector<256x128xf32> to vector<8x128xf32>
      %89 = arith.addf %85, %88 : vector<8x128xf32>
      %90 = vector.extract_strided_slice %12 {offsets = [152, 0], sizes = [8, 128], strides = [1, 1]} : vector<256x128xf32> to vector<8x128xf32>
      %91 = arith.addf %87, %90 : vector<8x128xf32>
      %92 = vector.extract_strided_slice %15 {offsets = [152, 0], sizes = [8, 128], strides = [1, 1]} : vector<256x128xf32> to vector<8x128xf32>
      %93 = arith.addf %89, %92 : vector<8x128xf32>
      %94 = vector.extract_strided_slice %12 {offsets = [160, 0], sizes = [8, 128], strides = [1, 1]} : vector<256x128xf32> to vector<8x128xf32>
      %95 = arith.addf %91, %94 : vector<8x128xf32>
      %96 = vector.extract_strided_slice %15 {offsets = [160, 0], sizes = [8, 128], strides = [1, 1]} : vector<256x128xf32> to vector<8x128xf32>
      %97 = arith.addf %93, %96 : vector<8x128xf32>
      %98 = vector.extract_strided_slice %12 {offsets = [168, 0], sizes = [8, 128], strides = [1, 1]} : vector<256x128xf32> to vector<8x128xf32>
      %99 = arith.addf %95, %98 : vector<8x128xf32>
      %100 = vector.extract_strided_slice %15 {offsets = [168, 0], sizes = [8, 128], strides = [1, 1]} : vector<256x128xf32> to vector<8x128xf32>
      %101 = arith.addf %97, %100 : vector<8x128xf32>
      %102 = vector.extract_strided_slice %12 {offsets = [176, 0], sizes = [8, 128], strides = [1, 1]} : vector<256x128xf32> to vector<8x128xf32>
      %103 = arith.addf %99, %102 : vector<8x128xf32>
      %104 = vector.extract_strided_slice %15 {offsets = [176, 0], sizes = [8, 128], strides = [1, 1]} : vector<256x128xf32> to vector<8x128xf32>
      %105 = arith.addf %101, %104 : vector<8x128xf32>
      %106 = vector.extract_strided_slice %12 {offsets = [184, 0], sizes = [8, 128], strides = [1, 1]} : vector<256x128xf32> to vector<8x128xf32>
      %107 = arith.addf %103, %106 : vector<8x128xf32>
      %108 = vector.extract_strided_slice %15 {offsets = [184, 0], sizes = [8, 128], strides = [1, 1]} : vector<256x128xf32> to vector<8x128xf32>
      %109 = arith.addf %105, %108 : vector<8x128xf32>
      %110 = vector.extract_strided_slice %12 {offsets = [192, 0], sizes = [8, 128], strides = [1, 1]} : vector<256x128xf32> to vector<8x128xf32>
      %111 = arith.addf %107, %110 : vector<8x128xf32>
      %112 = vector.extract_strided_slice %15 {offsets = [192, 0], sizes = [8, 128], strides = [1, 1]} : vector<256x128xf32> to vector<8x128xf32>
      %113 = arith.addf %109, %112 : vector<8x128xf32>
      %114 = vector.extract_strided_slice %12 {offsets = [200, 0], sizes = [8, 128], strides = [1, 1]} : vector<256x128xf32> to vector<8x128xf32>
      %115 = arith.addf %111, %114 : vector<8x128xf32>
      %116 = vector.extract_strided_slice %15 {offsets = [200, 0], sizes = [8, 128], strides = [1, 1]} : vector<256x128xf32> to vector<8x128xf32>
      %117 = arith.addf %113, %116 : vector<8x128xf32>
      %118 = vector.extract_strided_slice %12 {offsets = [208, 0], sizes = [8, 128], strides = [1, 1]} : vector<256x128xf32> to vector<8x128xf32>
      %119 = arith.addf %115, %118 : vector<8x128xf32>
      %120 = vector.extract_strided_slice %15 {offsets = [208, 0], sizes = [8, 128], strides = [1, 1]} : vector<256x128xf32> to vector<8x128xf32>
      %121 = arith.addf %117, %120 : vector<8x128xf32>
      %122 = vector.extract_strided_slice %12 {offsets = [216, 0], sizes = [8, 128], strides = [1, 1]} : vector<256x128xf32> to vector<8x128xf32>
      %123 = arith.addf %119, %122 : vector<8x128xf32>
      %124 = vector.extract_strided_slice %15 {offsets = [216, 0], sizes = [8, 128], strides = [1, 1]} : vector<256x128xf32> to vector<8x128xf32>
      %125 = arith.addf %121, %124 : vector<8x128xf32>
      %126 = vector.extract_strided_slice %12 {offsets = [224, 0], sizes = [8, 128], strides = [1, 1]} : vector<256x128xf32> to vector<8x128xf32>
      %127 = arith.addf %123, %126 : vector<8x128xf32>
      %128 = vector.extract_strided_slice %15 {offsets = [224, 0], sizes = [8, 128], strides = [1, 1]} : vector<256x128xf32> to vector<8x128xf32>
      %129 = arith.addf %125, %128 : vector<8x128xf32>
      %130 = vector.extract_strided_slice %12 {offsets = [232, 0], sizes = [8, 128], strides = [1, 1]} : vector<256x128xf32> to vector<8x128xf32>
      %131 = arith.addf %127, %130 : vector<8x128xf32>
      %132 = vector.extract_strided_slice %15 {offsets = [232, 0], sizes = [8, 128], strides = [1, 1]} : vector<256x128xf32> to vector<8x128xf32>
      %133 = arith.addf %129, %132 : vector<8x128xf32>
      %134 = vector.extract_strided_slice %12 {offsets = [240, 0], sizes = [8, 128], strides = [1, 1]} : vector<256x128xf32> to vector<8x128xf32>
      %135 = arith.addf %131, %134 : vector<8x128xf32>
      %136 = vector.extract_strided_slice %15 {offsets = [240, 0], sizes = [8, 128], strides = [1, 1]} : vector<256x128xf32> to vector<8x128xf32>
      %137 = arith.addf %133, %136 : vector<8x128xf32>
      %138 = vector.extract_strided_slice %12 {offsets = [248, 0], sizes = [8, 128], strides = [1, 1]} : vector<256x128xf32> to vector<8x128xf32>
      %139 = arith.addf %135, %138 : vector<8x128xf32>
      %140 = vector.extract_strided_slice %15 {offsets = [248, 0], sizes = [8, 128], strides = [1, 1]} : vector<256x128xf32> to vector<8x128xf32>
      %141 = arith.addf %137, %140 : vector<8x128xf32>
      %c0_14 = arith.constant 0 : index
      %c0_15 = arith.constant 0 : index
      %142 = vector.load %arg6[%c0_14, %c0_15] : memref<8x128xf32, #tpu.memory_space<vmem>>, vector<8x128xf32>
      tpu.vector_store %arg6[%c0_14, %c0_15], %139 {strides = array<i32>} : memref<8x128xf32, #tpu.memory_space<vmem>>, vector<8x128xf32>,
      %c0_16 = arith.constant 0 : index
      %c0_17 = arith.constant 0 : index
      %143 = vector.load %arg7[%c0_16, %c0_17] : memref<8x128xf32, #tpu.memory_space<vmem>>, vector<8x128xf32>
      tpu.vector_store %arg7[%c0_16, %c0_17], %141 {strides = array<i32>} : memref<8x128xf32, #tpu.memory_space<vmem>>, vector<8x128xf32>,
    } else {
    }
    return
  }
  func.func @transform_0(%arg0: i32, %arg1: i32, %arg2: i32) -> (i32, i32) {
    %c0_i32 = arith.constant 0 : i32
    return %arg0, %arg2 : i32, i32
  }
  func.func @transform_1(%arg0: i32, %arg1: i32, %arg2: i32) -> (i32, i32) {
    %c0_i32 = arith.constant 0 : i32
    return %arg2, %arg1 : i32, i32
  }
  func.func @transform_2(%arg0: i32, %arg1: i32, %arg2: i32) -> (i32, i32) {
    %c0_i32 = arith.constant 0 : i32
    return %arg0, %arg1 : i32, i32
  }
  func.func @transform_3(%arg0: i32, %arg1: i32, %arg2: i32) -> (i32, i32) {
    %c0_i32 = arith.constant 0 : i32
    return %arg0, %arg1 : i32, i32
  }
  func.func @transform_4(%arg0: i32, %arg1: i32, %arg2: i32) -> (i32, i32) {
    %c0_i32 = arith.constant 0 : i32
    return %arg0, %arg1 : i32, i32
  }
}

module attributes {stable_mosaic.version = 11 : i64} {
  func.func @_bn_scale_relu_kernel(%arg0: i32, %arg1: memref<512x128xbf16, #tpu.memory_space<vmem>>, %arg2: memref<1x128xf32, #tpu.memory_space<vmem>>, %arg3: memref<1x128xf32, #tpu.memory_space<vmem>>, %arg4: memref<512x128xbf16, #tpu.memory_space<vmem>>) attributes {dimension_semantics = [#tpu.dimension_semantics<parallel>], iteration_bounds = array<i64: 1>, scalar_prefetch = 0 : i64, scratch_operands = 0 : i64, tpu.core_type = #tpu.core_type<tc>, window_params = [{transform_indices = @transform_0, window_bounds = array<i64: 512, 128>}, {pipeline_mode = #tpu.pipeline_mode<synchronous>, transform_indices = @transform_1, window_bounds = array<i64: 1, 128>}, {pipeline_mode = #tpu.pipeline_mode<synchronous>, transform_indices = @transform_2, window_bounds = array<i64: 1, 128>}, {transform_indices = @transform_3, window_bounds = array<i64: 512, 128>}]} {
    %c0 = arith.constant 0 : index
    %c0_0 = arith.constant 0 : index
    %0 = vector.load %arg1[%c0, %c0_0] : memref<512x128xbf16, #tpu.memory_space<vmem>>, vector<512x128xbf16>
    %1 = arith.extf %0 : vector<512x128xbf16> to vector<512x128xf32>
    %c0_1 = arith.constant 0 : index
    %c0_2 = arith.constant 0 : index
    %2 = vector.load %arg2[%c0_1, %c0_2] : memref<1x128xf32, #tpu.memory_space<vmem>>, vector<1x128xf32>
    %3 = vector.broadcast %2 : vector<1x128xf32> to vector<512x128xf32>
    %4 = arith.mulf %1, %3 : vector<512x128xf32>
    %c0_3 = arith.constant 0 : index
    %c0_4 = arith.constant 0 : index
    %5 = vector.load %arg3[%c0_3, %c0_4] : memref<1x128xf32, #tpu.memory_space<vmem>>, vector<1x128xf32>
    %6 = vector.broadcast %5 : vector<1x128xf32> to vector<512x128xf32>
    %7 = arith.addf %4, %6 : vector<512x128xf32>
    %cst = arith.constant 0.000000e+00 : f32
    %8 = vector.broadcast %cst : f32 to vector<512x128xf32>
    %9 = arith.maximumf %7, %8 : vector<512x128xf32>
    %10 = arith.truncf %9 : vector<512x128xf32> to vector<512x128xbf16>
    %c0_5 = arith.constant 0 : index
    %c0_6 = arith.constant 0 : index
    %11 = vector.load %arg4[%c0_5, %c0_6] : memref<512x128xbf16, #tpu.memory_space<vmem>>, vector<512x128xbf16>
    tpu.vector_store %arg4[%c0_5, %c0_6], %10 {strides = array<i32>} : memref<512x128xbf16, #tpu.memory_space<vmem>>, vector<512x128xbf16>,
    return
  }
  func.func @transform_0(%arg0: i32) -> (i32, i32) {
    %c0_i32 = arith.constant 0 : i32
    %c0_i32_0 = arith.constant 0 : i32
    return %arg0, %c0_i32 : i32, i32
  }
  func.func @transform_1(%arg0: i32) -> (i32, i32) {
    %c0_i32 = arith.constant 0 : i32
    %c0_i32_0 = arith.constant 0 : i32
    %c0_i32_1 = arith.constant 0 : i32
    return %c0_i32, %c0_i32_0 : i32, i32
  }
  func.func @transform_2(%arg0: i32) -> (i32, i32) {
    %c0_i32 = arith.constant 0 : i32
    %c0_i32_0 = arith.constant 0 : i32
    %c0_i32_1 = arith.constant 0 : i32
    return %c0_i32, %c0_i32_0 : i32, i32
  }
  func.func @transform_3(%arg0: i32) -> (i32, i32) {
    %c0_i32 = arith.constant 0 : i32
    %c0_i32_0 = arith.constant 0 : i32
    return %arg0, %c0_i32 : i32, i32
  }
}

</mosaic_0001>

<llo_original>
// kernel: conv_bn_act.3
$region0: #{conv_bn_act.3}
  #allocation0 [shape = 'u32[]', space=smem, size = 0x4, offset = 0x4, fixed_abs, tag = 'smem constant byte address 0x4 - core index']
  #allocation1 [shape = 'u32[144,128]{1,0:T(1,128)}', space=vmem, size = 0x12000, scoped, tag = 'internal scratch']
  %s0 = inlined_call_operand.vmem [shape: bf16[512,128], index: 0, kind: input, shape index: {}]
  %s1 = inlined_call_operand.vmem [shape: f32[1,128], index: 1, kind: input, shape index: {}]
  %s2 = inlined_call_operand.vmem [shape: f32[1,128], index: 2, kind: input, shape index: {}]
  %s3 = inlined_call_operand.hbm [shape: bf16[512,128], index: 3, kind: output, shape index: {}]
  %s4 = sld [smem:[#allocation0]]
  $region22: #{conv_bn_act.3} parent=0
    _
  %s6 = ssub.s32 1, %s4
  %s7 = scalar_select 0, %s6, %s4
  $region1: #{conv_bn_act.3} parent=0
    #allocation2 [shape = 'u8[131072]{0}', space=vmem, size = 0x20000, scoped, tag = 'output window, operand 0, single buffered']
    #allocation3 [shape = 's32[1]{0}', space=sflag, size = 0x4, scoped, tag = 'scoped memory for conv_bn_act.3']
    %8 = vsyncpa [#allocation3], 0
    // Predicated region
    $region2: #{conv_bn_act.3} parent=1 // pred_check
      _
    $region3: #{conv_bn_act.3} parent=1 // pred_check_branch
      %10 = sbr.rel (0) target = $region5
    $region4: #{conv_bn_act.3} parent=1 // pred_region
      _
    $region5: #{conv_bn_act.3} parent=1 // pred_fallthru
      _
    // Predicated region
    $region6: #{conv_bn_act.3} parent=1 // pred_check
      _
    $region7: #{conv_bn_act.3} parent=1 // pred_check_branch
      %12 = sbr.rel (0) target = $region9
    $region8: #{conv_bn_act.3} parent=1 // pred_region
      _
    $region9: #{conv_bn_act.3} parent=1 // pred_fallthru
      _
    // Predicated region
    $region10: #{conv_bn_act.3} parent=1 // pred_check
      _
    $region11: #{conv_bn_act.3} parent=1 // pred_check_branch
      %14 = sbr.rel (0) target = $region13
    $region12: #{conv_bn_act.3} parent=1 // pred_region
      _
    $region13: #{conv_bn_act.3} parent=1 // pred_fallthru
      _
    %v15 = vld [vmem:[%s0] sm:$0xf]
    %v16 = vld [vmem:[%s0 + $0x4] sm:$0xf]
    %v17 = vld [vmem:[%s0 + $0x8] sm:$0xf]
    %v18 = vld [vmem:[%s0 + $0xc] sm:$0xf]
    %v19 = vld [vmem:[%s0 + $0x10] sm:$0xf]
    %v20 = vld [vmem:[%s0 + $0x14] sm:$0xf]
    %v21 = vld [vmem:[%s0 + $0x18] sm:$0xf]
    %v22 = vld [vmem:[%s0 + $0x1c] sm:$0xf]
    %v23 = vld [vmem:[%s0 + $0x20] sm:$0xf]
    %v24 = vld [vmem:[%s0 + $0x24] sm:$0xf]
    %v25 = vld [vmem:[%s0 + $0x28] sm:$0xf]
    %v26 = vld [vmem:[%s0 + $0x2c] sm:$0xf]
    %v27 = vld [vmem:[%s0 + $0x30] sm:$0xf]
    %v28 = vld [vmem:[%s0 + $0x34] sm:$0xf]
    %v29 = vld [vmem:[%s0 + $0x38] sm:$0xf]
    %v30 = vld [vmem:[%s0 + $0x3c] sm:$0xf]
    %v31 = vld [vmem:[%s0 + $0x40] sm:$0xf]
    %v32 = vld [vmem:[%s0 + $0x44] sm:$0xf]
    %v33 = vld [vmem:[%s0 + $0x48] sm:$0xf]
    %v34 = vld [vmem:[%s0 + $0x4c] sm:$0xf]
    %v35 = vld [vmem:[%s0 + $0x50] sm:$0xf]
    %v36 = vld [vmem:[%s0 + $0x54] sm:$0xf]
    %v37 = vld [vmem:[%s0 + $0x58] sm:$0xf]
    %v38 = vld [vmem:[%s0 + $0x5c] sm:$0xf]
    %v39 = vld [vmem:[%s0 + $0x60] sm:$0xf]
    %v40 = vld [vmem:[%s0 + $0x64] sm:$0xf]
    %v41 = vld [vmem:[%s0 + $0x68] sm:$0xf]
    %v42 = vld [vmem:[%s0 + $0x6c] sm:$0xf]
    %v43 = vld [vmem:[%s0 + $0x70] sm:$0xf]
    %v44 = vld [vmem:[%s0 + $0x74] sm:$0xf]
    %v45 = vld [vmem:[%s0 + $0x78] sm:$0xf]
    %v46 = vld [vmem:[%s0 + $0x7c] sm:$0xf]
    %v47 = vld [vmem:[%s0 + $0x80] sm:$0xf]
    %v48 = vld [vmem:[%s0 + $0x84] sm:$0xf]
    %v49 = vld [vmem:[%s0 + $0x88] sm:$0xf]
    %v50 = vld [vmem:[%s0 + $0x8c] sm:$0xf]
    %v51 = vld [vmem:[%s0 + $0x90] sm:$0xf]
    %v52 = vld [vmem:[%s0 + $0x94] sm:$0xf]
    %v53 = vld [vmem:[%s0 + $0x98] sm:$0xf]
    %v54 = vld [vmem:[%s0 + $0x9c] sm:$0xf]
    %v55 = vld [vmem:[%s0 + $0xa0] sm:$0xf]
    %v56 = vld [vmem:[%s0 + $0xa4] sm:$0xf]
    %v57 = vld [vmem:[%s0 + $0xa8] sm:$0xf]
    %v58 = vld [vmem:[%s0 + $0xac] sm:$0xf]
    %v59 = vld [vmem:[%s0 + $0xb0] sm:$0xf]
    %v60 = vld [vmem:[%s0 + $0xb4] sm:$0xf]
    %v61 = vld [vmem:[%s0 + $0xb8] sm:$0xf]
    %v62 = vld [vmem:[%s0 + $0xbc] sm:$0xf]
    %v63 = vld [vmem:[%s0 + $0xc0] sm:$0xf]
    %v64 = vld [vmem:[%s0 + $0xc4] sm:$0xf]
    %v65 = vld [vmem:[%s0 + $0xc8] sm:$0xf]
    %v66 = vld [vmem:[%s0 + $0xcc] sm:$0xf]
    %v67 = vld [vmem:[%s0 + $0xd0] sm:$0xf]
    %v68 = vld [vmem:[%s0 + $0xd4] sm:$0xf]
    %v69 = vld [vmem:[%s0 + $0xd8] sm:$0xf]
    %v70 = vld [vmem:[%s0 + $0xdc] sm:$0xf]
    %v71 = vld [vmem:[%s0 + $0xe0] sm:$0xf]
    %v72 = vld [vmem:[%s0 + $0xe4] sm:$0xf]
    %v73 = vld [vmem:[%s0 + $0xe8] sm:$0xf]
    %v74 = vld [vmem:[%s0 + $0xec] sm:$0xf]
    %v75 = vld [vmem:[%s0 + $0xf0] sm:$0xf]
    %v76 = vld [vmem:[%s0 + $0xf4] sm:$0xf]
    %v77 = vld [vmem:[%s0 + $0xf8] sm:$0xf]
    %v78 = vld [vmem:[%s0 + $0xfc] sm:$0xf]
    %v79 = vunpack.c.l.bf16 %v15
    %v80 = vunpack.c.l.bf16 %v16
    %v81 = vunpack.c.l.bf16 %v17
    %v82 = vunpack.c.l.bf16 %v18
    %v83 = vunpack.c.l.bf16 %v19
    %v84 = vunpack.c.l.bf16 %v20
    %v85 = vunpack.c.l.bf16 %v21
    %v86 = vunpack.c.l.bf16 %v22
    %v87 = vunpack.c.l.bf16 %v23
    %v88 = vunpack.c.l.bf16 %v24
    %v89 = vunpack.c.l.bf16 %v25
    %v90 = vunpack.c.l.bf16 %v26
    %v91 = vunpack.c.l.bf16 %v27
    %v92 = vunpack.c.l.bf16 %v28
    %v93 = vunpack.c.l.bf16 %v29
    %v94 = vunpack.c.l.bf16 %v30
    %v95 = vunpack.c.l.bf16 %v31
    %v96 = vunpack.c.l.bf16 %v32
    %v97 = vunpack.c.l.bf16 %v33
    %v98 = vunpack.c.l.bf16 %v34
    %v99 = vunpack.c.l.bf16 %v35
    %v100 = vunpack.c.l.bf16 %v36
    %v101 = vunpack.c.l.bf16 %v37
    %v102 = vunpack.c.l.bf16 %v38
    %v103 = vunpack.c.l.bf16 %v39
    %v104 = vunpack.c.l.bf16 %v40
    %v105 = vunpack.c.l.bf16 %v41
    %v106 = vunpack.c.l.bf16 %v42
    %v107 = vunpack.c.l.bf16 %v43
    %v108 = vunpack.c.l.bf16 %v44
    %v109 = vunpack.c.l.bf16 %v45
    %v110 = vunpack.c.l.bf16 %v46
    %v111 = vunpack.c.l.bf16 %v47
    %v112 = vunpack.c.l.bf16 %v48
    %v113 = vunpack.c.l.bf16 %v49
    %v114 = vunpack.c.l.bf16 %v50
    %v115 = vunpack.c.l.bf16 %v51
    %v116 = vunpack.c.l.bf16 %v52
    %v117 = vunpack.c.l.bf16 %v53
    %v118 = vunpack.c.l.bf16 %v54
    %v119 = vunpack.c.l.bf16 %v55
    %v120 = vunpack.c.l.bf16 %v56
    %v121 = vunpack.c.l.bf16 %v57
    %v122 = vunpack.c.l.bf16 %v58
    %v123 = vunpack.c.l.bf16 %v59
    %v124 = vunpack.c.l.bf16 %v60
    %v125 = vunpack.c.l.bf16 %v61
    %v126 = vunpack.c.l.bf16 %v62
    %v127 = vunpack.c.l.bf16 %v63
    %v128 = vunpack.c.l.bf16 %v64
    %v129 = vunpack.c.l.bf16 %v65
    %v130 = vunpack.c.l.bf16 %v66
    %v131 = vunpack.c.l.bf16 %v67
    %v132 = vunpack.c.l.bf16 %v68
    %v133 = vunpack.c.l.bf16 %v69
    %v134 = vunpack.c.l.bf16 %v70
    %v135 = vunpack.c.l.bf16 %v71
    %v136 = vunpack.c.l.bf16 %v72
    %v137 = vunpack.c.l.bf16 %v73
    %v138 = vunpack.c.l.bf16 %v74
    %v139 = vunpack.c.l.bf16 %v75
    %v140 = vunpack.c.l.bf16 %v76
    %v141 = vunpack.c.l.bf16 %v77
    %v142 = vunpack.c.l.bf16 %v78
    %v143 = vld [vmem:[%s1] sm:$0x1]
    %v145 = vlaneseq
    %v146 = vshrl.u32 %v145, 7
    %v147 = vsub.s32 0, %v146
    %v148 = vrot.slane %v143, %v147
    %v150 = vmul.f32 %v79, %v148
    %v151 = vmul.f32 %v80, %v148
    %v152 = vmul.f32 %v81, %v148
    %v153 = vmul.f32 %v82, %v148
    %v154 = vmul.f32 %v83, %v148
    %v155 = vmul.f32 %v84, %v148
    %v156 = vmul.f32 %v85, %v148
    %v157 = vmul.f32 %v86, %v148
    %v158 = vmul.f32 %v87, %v148
    %v159 = vmul.f32 %v88, %v148
    %v160 = vmul.f32 %v89, %v148
    %v161 = vmul.f32 %v90, %v148
    %v162 = vmul.f32 %v91, %v148
    %v163 = vmul.f32 %v92, %v148
    %v164 = vmul.f32 %v93, %v148
    %v165 = vmul.f32 %v94, %v148
    %v166 = vmul.f32 %v95, %v148
    %v167 = vmul.f32 %v96, %v148
    %v168 = vmul.f32 %v97, %v148
    %v169 = vmul.f32 %v98, %v148
    %v170 = vmul.f32 %v99, %v148
    %v171 = vmul.f32 %v100, %v148
    %v172 = vmul.f32 %v101, %v148
    %v173 = vmul.f32 %v102, %v148
    %v174 = vmul.f32 %v103, %v148
    %v175 = vmul.f32 %v104, %v148
    %v176 = vmul.f32 %v105, %v148
    %v177 = vmul.f32 %v106, %v148
    %v178 = vmul.f32 %v107, %v148
    %v179 = vmul.f32 %v108, %v148
    %v180 = vmul.f32 %v109, %v148
    %v181 = vmul.f32 %v110, %v148
    %v182 = vmul.f32 %v111, %v148
    %v183 = vmul.f32 %v112, %v148
    %v184 = vmul.f32 %v113, %v148
    %v185 = vmul.f32 %v114, %v148
    %v186 = vmul.f32 %v115, %v148
    %v187 = vmul.f32 %v116, %v148
    %v188 = vmul.f32 %v117, %v148
    %v189 = vmul.f32 %v118, %v148
    %v190 = vmul.f32 %v119, %v148
    %v191 = vmul.f32 %v120, %v148
    %v192 = vmul.f32 %v121, %v148
    %v193 = vmul.f32 %v122, %v148
    %v194 = vmul.f32 %v123, %v148
    %v195 = vmul.f32 %v124, %v148
    %v196 = vmul.f32 %v125, %v148
    %v197 = vmul.f32 %v126, %v148
    %v198 = vmul.f32 %v127, %v148
    %v199 = vmul.f32 %v128, %v148
    %v200 = vmul.f32 %v129, %v148
    %v201 = vmul.f32 %v130, %v148
    %v202 = vmul.f32 %v131, %v148
    %v203 = vmul.f32 %v132, %v148
    %v204 = vmul.f32 %v133, %v148
    %v205 = vmul.f32 %v134, %v148
    %v206 = vmul.f32 %v135, %v148
    %v207 = vmul.f32 %v136, %v148
    %v208 = vmul.f32 %v137, %v148
    %v209 = vmul.f32 %v138, %v148
    %v210 = vmul.f32 %v139, %v148
    %v211 = vmul.f32 %v140, %v148
    %v212 = vmul.f32 %v141, %v148
    %v213 = vmul.f32 %v142, %v148
    %v214 = vld [vmem:[%s2] sm:$0x1]
    %v216 = vlaneseq
    %v217 = vshrl.u32 %v216, 7
    %v218 = vsub.s32 0, %v217
    %v219 = vrot.slane %v214, %v218
    %v221 = vadd.f32 %v150, %v219
    %v222 = vadd.f32 %v151, %v219
    %v223 = vadd.f32 %v152, %v219
    %v224 = vadd.f32 %v153, %v219
    %v225 = vadd.f32 %v154, %v219
    %v226 = vadd.f32 %v155, %v219
    %v227 = vadd.f32 %v156, %v219
    %v228 = vadd.f32 %v157, %v219
    %v229 = vadd.f32 %v158, %v219
    %v230 = vadd.f32 %v159, %v219
    %v231 = vadd.f32 %v160, %v219
    %v232 = vadd.f32 %v161, %v219
    %v233 = vadd.f32 %v162, %v219
    %v234 = vadd.f32 %v163, %v219
    %v235 = vadd.f32 %v164, %v219
    %v236 = vadd.f32 %v165, %v219
    %v237 = vadd.f32 %v166, %v219
    %v238 = vadd.f32 %v167, %v219
    %v239 = vadd.f32 %v168, %v219
    %v240 = vadd.f32 %v169, %v219
    %v241 = vadd.f32 %v170, %v219
    %v242 = vadd.f32 %v171, %v219
    %v243 = vadd.f32 %v172, %v219
    %v244 = vadd.f32 %v173, %v219
    %v245 = vadd.f32 %v174, %v219
    %v246 = vadd.f32 %v175, %v219
    %v247 = vadd.f32 %v176, %v219
    %v248 = vadd.f32 %v177, %v219
    %v249 = vadd.f32 %v178, %v219
    %v250 = vadd.f32 %v179, %v219
    %v251 = vadd.f32 %v180, %v219
    %v252 = vadd.f32 %v181, %v219
    %v253 = vadd.f32 %v182, %v219
    %v254 = vadd.f32 %v183, %v219
    %v255 = vadd.f32 %v184, %v219
    %v256 = vadd.f32 %v185, %v219
    %v257 = vadd.f32 %v186, %v219
    %v258 = vadd.f32 %v187, %v219
    %v259 = vadd.f32 %v188, %v219
    %v260 = vadd.f32 %v189, %v219
    %v261 = vadd.f32 %v190, %v219
    %v262 = vadd.f32 %v191, %v219
    %v263 = vadd.f32 %v192, %v219
    %v264 = vadd.f32 %v193, %v219
    %v265 = vadd.f32 %v194, %v219
    %v266 = vadd.f32 %v195, %v219
    %v267 = vadd.f32 %v196, %v219
    %v268 = vadd.f32 %v197, %v219
    %v269 = vadd.f32 %v198, %v219
    %v270 = vadd.f32 %v199, %v219
    %v271 = vadd.f32 %v200, %v219
    %v272 = vadd.f32 %v201, %v219
    %v273 = vadd.f32 %v202, %v219
    %v274 = vadd.f32 %v203, %v219
    %v275 = vadd.f32 %v204, %v219
    %v276 = vadd.f32 %v205, %v219
    %v277 = vadd.f32 %v206, %v219
    %v278 = vadd.f32 %v207, %v219
    %v279 = vadd.f32 %v208, %v219
    %v280 = vadd.f32 %v209, %v219
    %v281 = vadd.f32 %v210, %v219
    %v282 = vadd.f32 %v211, %v219
    %v283 = vadd.f32 %v212, %v219
    %v284 = vadd.f32 %v213, %v219
    %v285 = vmax.f32 %v221, 0.0
    %v286 = vmax.f32 %v222, 0.0
    %v287 = vmax.f32 %v223, 0.0
    %v288 = vmax.f32 %v224, 0.0
    %v289 = vmax.f32 %v225, 0.0
    %v290 = vmax.f32 %v226, 0.0
    %v291 = vmax.f32 %v227, 0.0
    %v292 = vmax.f32 %v228, 0.0
    %v293 = vmax.f32 %v229, 0.0
    %v294 = vmax.f32 %v230, 0.0
    %v295 = vmax.f32 %v231, 0.0
    %v296 = vmax.f32 %v232, 0.0
    %v297 = vmax.f32 %v233, 0.0
    %v298 = vmax.f32 %v234, 0.0
    %v299 = vmax.f32 %v235, 0.0
    %v300 = vmax.f32 %v236, 0.0
    %v301 = vmax.f32 %v237, 0.0
    %v302 = vmax.f32 %v238, 0.0
    %v303 = vmax.f32 %v239, 0.0
    %v304 = vmax.f32 %v240, 0.0
    %v305 = vmax.f32 %v241, 0.0
    %v306 = vmax.f32 %v242, 0.0
    %v307 = vmax.f32 %v243, 0.0
    %v308 = vmax.f32 %v244, 0.0
    %v309 = vmax.f32 %v245, 0.0
    %v310 = vmax.f32 %v246, 0.0
    %v311 = vmax.f32 %v247, 0.0
    %v312 = vmax.f32 %v248, 0.0
    %v313 = vmax.f32 %v249, 0.0
    %v314 = vmax.f32 %v250, 0.0
    %v315 = vmax.f32 %v251, 0.0
    %v316 = vmax.f32 %v252, 0.0
    %v317 = vmax.f32 %v253, 0.0
    %v318 = vmax.f32 %v254, 0.0
    %v319 = vmax.f32 %v255, 0.0
    %v320 = vmax.f32 %v256, 0.0
    %v321 = vmax.f32 %v257, 0.0
    %v322 = vmax.f32 %v258, 0.0
    %v323 = vmax.f32 %v259, 0.0
    %v324 = vmax.f32 %v260, 0.0
    %v325 = vmax.f32 %v261, 0.0
    %v326 = vmax.f32 %v262, 0.0
    %v327 = vmax.f32 %v263, 0.0
    %v328 = vmax.f32 %v264, 0.0
    %v329 = vmax.f32 %v265, 0.0
    %v330 = vmax.f32 %v266, 0.0
    %v331 = vmax.f32 %v267, 0.0
    %v332 = vmax.f32 %v268, 0.0
    %v333 = vmax.f32 %v269, 0.0
    %v334 = vmax.f32 %v270, 0.0
    %v335 = vmax.f32 %v271, 0.0
    %v336 = vmax.f32 %v272, 0.0
    %v337 = vmax.f32 %v273, 0.0
    %v338 = vmax.f32 %v274, 0.0
    %v339 = vmax.f32 %v275, 0.0
    %v340 = vmax.f32 %v276, 0.0
    %v341 = vmax.f32 %v277, 0.0
    %v342 = vmax.f32 %v278, 0.0
    %v343 = vmax.f32 %v279, 0.0
    %v344 = vmax.f32 %v280, 0.0
    %v345 = vmax.f32 %v281, 0.0
    %v346 = vmax.f32 %v282, 0.0
    %v347 = vmax.f32 %v283, 0.0
    %v348 = vmax.f32 %v284, 0.0
    %v349 = vpack.c.bf16 %v286, %v285
    %v350 = vpack.c.bf16 %v288, %v287
    %v351 = vpack.c.bf16 %v290, %v289
    %v352 = vpack.c.bf16 %v292, %v291
    %v353 = vpack.c.bf16 %v294, %v293
    %v354 = vpack.c.bf16 %v296, %v295
    %v355 = vpack.c.bf16 %v298, %v297
    %v356 = vpack.c.bf16 %v300, %v299
    %v357 = vpack.c.bf16 %v302, %v301
    %v358 = vpack.c.bf16 %v304, %v303
    %v359 = vpack.c.bf16 %v306, %v305
    %v360 = vpack.c.bf16 %v308, %v307
    %v361 = vpack.c.bf16 %v310, %v309
    %v362 = vpack.c.bf16 %v312, %v311
    %v363 = vpack.c.bf16 %v314, %v313
    %v364 = vpack.c.bf16 %v316, %v315
    %v365 = vpack.c.bf16 %v318, %v317
    %v366 = vpack.c.bf16 %v320, %v319
    %v367 = vpack.c.bf16 %v322, %v321
    %v368 = vpack.c.bf16 %v324, %v323
    %v369 = vpack.c.bf16 %v326, %v325
    %v370 = vpack.c.bf16 %v328, %v327
    %v371 = vpack.c.bf16 %v330, %v329
    %v372 = vpack.c.bf16 %v332, %v331
    %v373 = vpack.c.bf16 %v334, %v333
    %v374 = vpack.c.bf16 %v336, %v335
    %v375 = vpack.c.bf16 %v338, %v337
    %v376 = vpack.c.bf16 %v340, %v339
    %v377 = vpack.c.bf16 %v342, %v341
    %v378 = vpack.c.bf16 %v344, %v343
    %v379 = vpack.c.bf16 %v346, %v345
    %v380 = vpack.c.bf16 %v348, %v347
    %v413 = vunpack.c.l.b16 %v349
    %v414 = vunpack.c.h.b16 %v349
    %v415 = vunpack.c.l.b16 %v350
    %v416 = vunpack.c.h.b16 %v350
    %v417 = vunpack.c.l.b16 %v351
    %v418 = vunpack.c.h.b16 %v351
    %v419 = vunpack.c.l.b16 %v352
    %v420 = vunpack.c.h.b16 %v352
    %v421 = vunpack.c.l.b16 %v353
    %v422 = vunpack.c.h.b16 %v353
    %v423 = vunpack.c.l.b16 %v354
    %v424 = vunpack.c.h.b16 %v354
    %v425 = vunpack.c.l.b16 %v355
    %v426 = vunpack.c.h.b16 %v355
    %v427 = vunpack.c.l.b16 %v356
    %v428 = vunpack.c.h.b16 %v356
    %v429 = vunpack.c.l.b16 %v357
    %v430 = vunpack.c.h.b16 %v357
    %v431 = vunpack.c.l.b16 %v358
    %v432 = vunpack.c.h.b16 %v358
    %v433 = vunpack.c.l.b16 %v359
    %v434 = vunpack.c.h.b16 %v359
    %v435 = vunpack.c.l.b16 %v360
    %v436 = vunpack.c.h.b16 %v360
    %v437 = vunpack.c.l.b16 %v361
    %v438 = vunpack.c.h.b16 %v361
    %v439 = vunpack.c.l.b16 %v362
    %v440 = vunpack.c.h.b16 %v362
    %v441 = vunpack.c.l.b16 %v363
    %v442 = vunpack.c.h.b16 %v363
    %v443 = vunpack.c.l.b16 %v364
    %v444 = vunpack.c.h.b16 %v364
    %v445 = vunpack.c.l.b16 %v365
    %v446 = vunpack.c.h.b16 %v365
    %v447 = vunpack.c.l.b16 %v366
    %v448 = vunpack.c.h.b16 %v366
    %v449 = vunpack.c.l.b16 %v367
    %v450 = vunpack.c.h.b16 %v367
    %v451 = vunpack.c.l.b16 %v368
    %v452 = vunpack.c.h.b16 %v368
    %v453 = vunpack.c.l.b16 %v369
    %v454 = vunpack.c.h.b16 %v369
    %v455 = vunpack.c.l.b16 %v370
    %v456 = vunpack.c.h.b16 %v370
    %v457 = vunpack.c.l.b16 %v371
    %v458 = vunpack.c.h.b16 %v371
    %v459 = vunpack.c.l.b16 %v372
    %v460 = vunpack.c.h.b16 %v372
    %v461 = vunpack.c.l.b16 %v373
    %v462 = vunpack.c.h.b16 %v373
    %v463 = vunpack.c.l.b16 %v374
    %v464 = vunpack.c.h.b16 %v374
    %v465 = vunpack.c.l.b16 %v375
    %v466 = vunpack.c.h.b16 %v375
    %v467 = vunpack.c.l.b16 %v376
    %v468 = vunpack.c.h.b16 %v376
    %v469 = vunpack.c.l.b16 %v377
    %v470 = vunpack.c.h.b16 %v377
    %v471 = vunpack.c.l.b16 %v378
    %v472 = vunpack.c.h.b16 %v378
    %v473 = vunpack.c.l.b16 %v379
    %v474 = vunpack.c.h.b16 %v379
    %v475 = vunpack.c.l.b16 %v380
    %v476 = vunpack.c.h.b16 %v380
    %v477 = vpack.c.b16 %v413, %v413
    %v478 = vpack.c.b16 %v414, %v414
    %v479 = vpack.c.b16 %v415, %v415
    %v480 = vpack.c.b16 %v416, %v416
    %v481 = vpack.c.b16 %v417, %v417
    %v482 = vpack.c.b16 %v418, %v418
    %v483 = vpack.c.b16 %v419, %v419
    %v484 = vpack.c.b16 %v420, %v420
    %v485 = vpack.c.b16 %v421, %v421
    %v486 = vpack.c.b16 %v422, %v422
    %v487 = vpack.c.b16 %v423, %v423
    %v488 = vpack.c.b16 %v424, %v424
    %v489 = vpack.c.b16 %v425, %v425
    %v490 = vpack.c.b16 %v426, %v426
    %v491 = vpack.c.b16 %v427, %v427
    %v492 = vpack.c.b16 %v428, %v428
    %v493 = vpack.c.b16 %v429, %v429
    %v494 = vpack.c.b16 %v430, %v430
    %v495 = vpack.c.b16 %v431, %v431
    %v496 = vpack.c.b16 %v432, %v432
    %v497 = vpack.c.b16 %v433, %v433
    %v498 = vpack.c.b16 %v434, %v434
    %v499 = vpack.c.b16 %v435, %v435
    %v500 = vpack.c.b16 %v436, %v436
    %v501 = vpack.c.b16 %v437, %v437
    %v502 = vpack.c.b16 %v438, %v438
    %v503 = vpack.c.b16 %v439, %v439
    %v504 = vpack.c.b16 %v440, %v440
    %v505 = vpack.c.b16 %v441, %v441
    %v506 = vpack.c.b16 %v442, %v442
    %v507 = vpack.c.b16 %v443, %v443
    %v508 = vpack.c.b16 %v444, %v444
    %v509 = vpack.c.b16 %v445, %v445
    %v510 = vpack.c.b16 %v446, %v446
    %v511 = vpack.c.b16 %v447, %v447
    %v512 = vpack.c.b16 %v448, %v448
    %v513 = vpack.c.b16 %v449, %v449
    %v514 = vpack.c.b16 %v450, %v450
    %v515 = vpack.c.b16 %v451, %v451
    %v516 = vpack.c.b16 %v452, %v452
    %v517 = vpack.c.b16 %v453, %v453
    %v518 = vpack.c.b16 %v454, %v454
    %v519 = vpack.c.b16 %v455, %v455
    %v520 = vpack.c.b16 %v456, %v456
    %v521 = vpack.c.b16 %v457, %v457
    %v522 = vpack.c.b16 %v458, %v458
    %v523 = vpack.c.b16 %v459, %v459
    %v524 = vpack.c.b16 %v460, %v460
    %v525 = vpack.c.b16 %v461, %v461
    %v526 = vpack.c.b16 %v462, %v462
    %v527 = vpack.c.b16 %v463, %v463
    %v528 = vpack.c.b16 %v464, %v464
    %v529 = vpack.c.b16 %v465, %v465
    %v530 = vpack.c.b16 %v466, %v466
    %v531 = vpack.c.b16 %v467, %v467
    %v532 = vpack.c.b16 %v468, %v468
    %v533 = vpack.c.b16 %v469, %v469
    %v534 = vpack.c.b16 %v470, %v470
    %v535 = vpack.c.b16 %v471, %v471
    %v536 = vpack.c.b16 %v472, %v472
    %v537 = vpack.c.b16 %v473, %v473
    %v538 = vpack.c.b16 %v474, %v474
    %v539 = vpack.c.b16 %v475, %v475
    %v540 = vpack.c.b16 %v476, %v476
    %605 = vst [vmem:[#allocation2] sm:$0xf] %v477
    %606 = vst [vmem:[#allocation2 + $0x4] sm:$0xf] %v478
    %607 = vst [vmem:[#allocation2 + $0x8] sm:$0xf] %v479
    %608 = vst [vmem:[#allocation2 + $0xc] sm:$0xf] %v480
    %609 = vst [vmem:[#allocation2 + $0x10] sm:$0xf] %v481
    %610 = vst [vmem:[#allocation2 + $0x14] sm:$0xf] %v482
    %611 = vst [vmem:[#allocation2 + $0x18] sm:$0xf] %v483
    %612 = vst [vmem:[#allocation2 + $0x1c] sm:$0xf] %v484
    %613 = vst [vmem:[#allocation2 + $0x20] sm:$0xf] %v485
    %614 = vst [vmem:[#allocation2 + $0x24] sm:$0xf] %v486
    %615 = vst [vmem:[#allocation2 + $0x28] sm:$0xf] %v487
    %616 = vst [vmem:[#allocation2 + $0x2c] sm:$0xf] %v488
    %617 = vst [vmem:[#allocation2 + $0x30] sm:$0xf] %v489
    %618 = vst [vmem:[#allocation2 + $0x34] sm:$0xf] %v490
    %619 = vst [vmem:[#allocation2 + $0x38] sm:$0xf] %v491
    %620 = vst [vmem:[#allocation2 + $0x3c] sm:$0xf] %v492
    %621 = vst [vmem:[#allocation2 + $0x40] sm:$0xf] %v493
    %622 = vst [vmem:[#allocation2 + $0x44] sm:$0xf] %v494
    %623 = vst [vmem:[#allocation2 + $0x48] sm:$0xf] %v495
    %624 = vst [vmem:[#allocation2 + $0x4c] sm:$0xf] %v496
    %625 = vst [vmem:[#allocation2 + $0x50] sm:$0xf] %v497
    %626 = vst [vmem:[#allocation2 + $0x54] sm:$0xf] %v498
    %627 = vst [vmem:[#allocation2 + $0x58] sm:$0xf] %v499
    %628 = vst [vmem:[#allocation2 + $0x5c] sm:$0xf] %v500
    %629 = vst [vmem:[#allocation2 + $0x60] sm:$0xf] %v501
    %630 = vst [vmem:[#allocation2 + $0x64] sm:$0xf] %v502
    %631 = vst [vmem:[#allocation2 + $0x68] sm:$0xf] %v503
    %632 = vst [vmem:[#allocation2 + $0x6c] sm:$0xf] %v504
    %633 = vst [vmem:[#allocation2 + $0x70] sm:$0xf] %v505
    %634 = vst [vmem:[#allocation2 + $0x74] sm:$0xf] %v506
    %635 = vst [vmem:[#allocation2 + $0x78] sm:$0xf] %v507
    %636 = vst [vmem:[#allocation2 + $0x7c] sm:$0xf] %v508
    %637 = vst [vmem:[#allocation2 + $0x80] sm:$0xf] %v509
    %638 = vst [vmem:[#allocation2 + $0x84] sm:$0xf] %v510
    %639 = vst [vmem:[#allocation2 + $0x88] sm:$0xf] %v511
    %640 = vst [vmem:[#allocation2 + $0x8c] sm:$0xf] %v512
    %641 = vst [vmem:[#allocation2 + $0x90] sm:$0xf] %v513
    %642 = vst [vmem:[#allocation2 + $0x94] sm:$0xf] %v514
    %643 = vst [vmem:[#allocation2 + $0x98] sm:$0xf] %v515
    %644 = vst [vmem:[#allocation2 + $0x9c] sm:$0xf] %v516
    %645 = vst [vmem:[#allocation2 + $0xa0] sm:$0xf] %v517
    %646 = vst [vmem:[#allocation2 + $0xa4] sm:$0xf] %v518
    %647 = vst [vmem:[#allocation2 + $0xa8] sm:$0xf] %v519
    %648 = vst [vmem:[#allocation2 + $0xac] sm:$0xf] %v520
    %649 = vst [vmem:[#allocation2 + $0xb0] sm:$0xf] %v521
    %650 = vst [vmem:[#allocation2 + $0xb4] sm:$0xf] %v522
    %651 = vst [vmem:[#allocation2 + $0xb8] sm:$0xf] %v523
    %652 = vst [vmem:[#allocation2 + $0xbc] sm:$0xf] %v524
    %653 = vst [vmem:[#allocation2 + $0xc0] sm:$0xf] %v525
    %654 = vst [vmem:[#allocation2 + $0xc4] sm:$0xf] %v526
    %655 = vst [vmem:[#allocation2 + $0xc8] sm:$0xf] %v527
    %656 = vst [vmem:[#allocation2 + $0xcc] sm:$0xf] %v528
    %657 = vst [vmem:[#allocation2 + $0xd0] sm:$0xf] %v529
    %658 = vst [vmem:[#allocation2 + $0xd4] sm:$0xf] %v530
    %659 = vst [vmem:[#allocation2 + $0xd8] sm:$0xf] %v531
    %660 = vst [vmem:[#allocation2 + $0xdc] sm:$0xf] %v532
    %661 = vst [vmem:[#allocation2 + $0xe0] sm:$0xf] %v533
    %662 = vst [vmem:[#allocation2 + $0xe4] sm:$0xf] %v534
    %663 = vst [vmem:[#allocation2 + $0xe8] sm:$0xf] %v535
    %664 = vst [vmem:[#allocation2 + $0xec] sm:$0xf] %v536
    %665 = vst [vmem:[#allocation2 + $0xf0] sm:$0xf] %v537
    %666 = vst [vmem:[#allocation2 + $0xf4] sm:$0xf] %v538
    %667 = vst [vmem:[#allocation2 + $0xf8] sm:$0xf] %v539
    %668 = vst [vmem:[#allocation2 + $0xfc] sm:$0xf] %v540
    // Predicated region
    $region14: #{conv_bn_act.3} parent=1 // pred_check
      _
    $region15: #{conv_bn_act.3} parent=1 // pred_check_branch
      %670 = sbr.rel (0) target = $region17
    $region16: #{conv_bn_act.3} parent=1 // pred_region
      %s672 = ssub.s32 4096, 4096
      %673 = vsyncadd [#allocation3], %s672
      %s674 = sshll.u32 [#allocation2], 4
      %s675 = int_to_ptr.vmem [resolvable:$true] %s674
      %680 = dma.vmem_to_hbm [thread:$0]  %s675, 4096, %s3, [#allocation3], 64, 64, 4
    $region17: #{conv_bn_act.3} parent=1 // pred_fallthru
      _
    // Predicated region
    $region18: #{conv_bn_act.3} parent=1 // pred_check
      _
    $region19: #{conv_bn_act.3} parent=1 // pred_check_branch
      %682 = sbr.rel (0) target = $region21
    $region20: #{conv_bn_act.3} parent=1 // pred_region
      %683 = dma.done [#allocation3], 4096
    $region21: #{conv_bn_act.3} parent=1 // pred_fallthru
      _
    %684 = vsyncpa [#allocation3], 1

// kernel: conv_bn_act.2
$region0: #{conv_bn_act.2}
  #allocation0 [shape = 'u32[]', space=smem, size = 0x4, offset = 0x4, fixed_abs, tag = 'smem constant byte address 0x4 - core index']
  #allocation1 [shape = 'u32[144,128]{1,0:T(1,128)}', space=vmem, size = 0x12000, scoped, tag = 'internal scratch']
  #allocation2 [shape = 'f32[256,128]{1,0:T(8,128)}', space=vmem, size = 0x20000, scoped, tag = 'scratch operand']
  %s0 = inlined_call_operand.vmem [shape: bf16[512,256], index: 0, kind: input, shape index: {}]
  %s1 = inlined_call_operand.vmem [shape: bf16[256,128], index: 1, kind: input, shape index: {}]
  %s2 = inlined_call_operand.vmem [shape: bf16[512,128], index: 2, kind: output, shape index: {0}]
  %s3 = inlined_call_operand.vmem [shape: f32[16,128], index: 3, kind: output, shape index: {1}]
  %s4 = inlined_call_operand.vmem [shape: f32[16,128], index: 4, kind: output, shape index: {2}]
  %5 = xla_tuple %s2, %s3, %s4
  %s6 = sld [smem:[#allocation0]]
  $region65: #{conv_bn_act.2} parent=0
    _
  %s8 = ssub.s32 1, %s6
  %s9 = scalar_select 0, %s8, %s6
  loop: start=0, step=1, limit=4
  $region2: #{conv_bn_act.2} parent=0 // loop_pre_header
    _
  $region3: #{conv_bn_act.2} parent=0 // loop_header
    %s11 = sphi 0, %s15
    %p12 = scmp.ge.s32.totalorder %s11, 4
    %s18 = sphi 0, %s37
    %s19 = sphi 0, %s33
    %s20 = sphi 0, %s29
    %s21 = sphi 0, %s18
    %s22 = sphi 0, %s19
    %s23 = sphi 0, %s20
    %s24 = sphi 0, %s21
    %s25 = sphi 0, %s22
    %s26 = sphi 0, %s23
    %s42 = sphi 0, %s44
    %s45 = sphi 0, %s42
    %s46 = sphi 0, %s45
    %s62 = sphi 0, %s46
    %s70 = sphi 0, %s72
    %s73 = sphi 0, %s70
    %s74 = sphi 0, %s73
    %s90 = sphi 0, %s74
    %s98 = sphi 0, %s100
    %s101 = sphi 0, %s98
    %s102 = sphi 0, %s101
    %s118 = sphi 0, %s102
    %s126 = sphi 0, %s128
    %s129 = sphi 0, %s126
    %s130 = sphi 0, %s129
    %s146 = sphi 0, %s130
    %s154 = sphi 0, %s156
    %s157 = sphi 0, %s154
    %s158 = sphi 0, %s157
    %s174 = sphi 0, %s158
  $region4: #{conv_bn_act.2} parent=0 // loop_header_branch
    %14 = sbr.rel (%p12) target = $region8
  $region5: #{conv_bn_act.2} parent=0 // loop_body
    %s16 = ssub.s32 %s11, 1
    %s17 = ssub.s32 %s11, 2
    %s27 = sadd.s32 1, %s20
    %p28 = scmp.ge.s32.totalorder %s27, 1
    %s29 = scalar_select %p28, 0, %s27
    %s30 = sadd.s32 1, %s19
    %s31 = scalar_select %p28, %s30, %s19
    %p32 = scmp.ge.s32.totalorder %s31, 1
    %s33 = scalar_select %p32, 0, %s31
    %s34 = sadd.s32 1, %s18
    %s35 = scalar_select %p32, %s34, %s18
    %p36 = scmp.ge.s32.totalorder %s35, 2
    %s37 = scalar_select %p36, 0, %s35
    %s38 = ssub.s32 %s18, %s37
    %s39 = ssub.s32 %s20, %s29
    %s40 = sor.u32 %s38, %s39
    %p41 = scmp.eq.s32.totalorder %s40, 0
    %s43 = sadd.s32 %s42, 1
    %s44 = scalar_select %p41, %s42, %s43
    %p47 = pneg %p41
    %p48 = scmp.eq.s32.totalorder %s11, 1
    %p49 = por %p47, %p48
    %p50 = scmp.ne.s32.totalorder %s42, %s45
    %p51 = scmp.eq.s32.totalorder %s11, 0
    %p52 = por %p50, %p51
    %p53 = scmp.ne.s32.totalorder %s42, %s45
    %p54 = scmp.eq.s32.totalorder %s16, 1
    %p55 = por %p53, %p54
    %p56 = scmp.ne.s32.totalorder %s45, %s46
    %p57 = scmp.eq.s32.totalorder %s16, 0
    %p58 = por %p56, %p57
    %p59 = scmp.ne.s32.totalorder %s45, %s46
    %p60 = scmp.eq.s32.totalorder %s17, 1
    %p61 = por %p59, %p60
    %p63 = scmp.ne.s32.totalorder %s46, %s62
    %p64 = scmp.eq.s32.totalorder %s17, 0
    %p65 = por %p63, %p64
    %s66 = ssub.s32 %s20, %s29
    %s67 = ssub.s32 %s19, %s33
    %s68 = sor.u32 %s66, %s67
    %p69 = scmp.eq.s32.totalorder %s68, 0
    %s71 = sadd.s32 %s70, 1
    %s72 = scalar_select %p69, %s70, %s71
    %p75 = pneg %p69
    %p76 = scmp.eq.s32.totalorder %s11, 1
    %p77 = por %p75, %p76
    %p78 = scmp.ne.s32.totalorder %s70, %s73
    %p79 = scmp.eq.s32.totalorder %s11, 0
    %p80 = por %p78, %p79
    %p81 = scmp.ne.s32.totalorder %s70, %s73
    %p82 = scmp.eq.s32.totalorder %s16, 1
    %p83 = por %p81, %p82
    %p84 = scmp.ne.s32.totalorder %s73, %s74
    %p85 = scmp.eq.s32.totalorder %s16, 0
    %p86 = por %p84, %p85
    %p87 = scmp.ne.s32.totalorder %s73, %s74
    %p88 = scmp.eq.s32.totalorder %s17, 1
    %p89 = por %p87, %p88
    %p91 = scmp.ne.s32.totalorder %s74, %s90
    %p92 = scmp.eq.s32.totalorder %s17, 0
    %p93 = por %p91, %p92
    %s94 = ssub.s32 %s18, %s37
    %s95 = ssub.s32 %s19, %s33
    %s96 = sor.u32 %s94, %s95
    %p97 = scmp.eq.s32.totalorder %s96, 0
    %s99 = sadd.s32 %s98, 1
    %s100 = scalar_select %p97, %s98, %s99
    %p103 = pneg %p97
    %p104 = scmp.eq.s32.totalorder %s11, 1
    %p105 = por %p103, %p104
    %p106 = scmp.ne.s32.totalorder %s98, %s101
    %p107 = scmp.eq.s32.totalorder %s11, 0
    %p108 = por %p106, %p107
    %p109 = scmp.ne.s32.totalorder %s98, %s101
    %p110 = scmp.eq.s32.totalorder %s16, 1
    %p111 = por %p109, %p110
    %p112 = scmp.ne.s32.totalorder %s101, %s102
    %p113 = scmp.eq.s32.totalorder %s16, 0
    %p114 = por %p112, %p113
    %p115 = scmp.ne.s32.totalorder %s101, %s102
    %p116 = scmp.eq.s32.totalorder %s17, 1
    %p117 = por %p115, %p116
    %p119 = scmp.ne.s32.totalorder %s102, %s118
    %p120 = scmp.eq.s32.totalorder %s17, 0
    %p121 = por %p119, %p120
    %s122 = ssub.s32 %s18, %s37
    %s123 = ssub.s32 %s19, %s33
    %s124 = sor.u32 %s122, %s123
    %p125 = scmp.eq.s32.totalorder %s124, 0
    %s127 = sadd.s32 %s126, 1
    %s128 = scalar_select %p125, %s126, %s127
    %p131 = pneg %p125
    %p132 = scmp.eq.s32.totalorder %s11, 1
    %p133 = por %p131, %p132
    %p134 = scmp.ne.s32.totalorder %s126, %s129
    %p135 = scmp.eq.s32.totalorder %s11, 0
    %p136 = por %p134, %p135
    %p137 = scmp.ne.s32.totalorder %s126, %s129
    %p138 = scmp.eq.s32.totalorder %s16, 1
    %p139 = por %p137, %p138
    %p140 = scmp.ne.s32.totalorder %s129, %s130
    %p141 = scmp.eq.s32.totalorder %s16, 0
    %p142 = por %p140, %p141
    %p143 = scmp.ne.s32.totalorder %s129, %s130
    %p144 = scmp.eq.s32.totalorder %s17, 1
    %p145 = por %p143, %p144
    %p147 = scmp.ne.s32.totalorder %s130, %s146
    %p148 = scmp.eq.s32.totalorder %s17, 0
    %p149 = por %p147, %p148
    %s150 = ssub.s32 %s18, %s37
    %s151 = ssub.s32 %s19, %s33
    %s152 = sor.u32 %s150, %s151
    %p153 = scmp.eq.s32.totalorder %s152, 0
    %s155 = sadd.s32 %s154, 1
    %s156 = scalar_select %p153, %s154, %s155
    %p159 = pneg %p153
    %p160 = scmp.eq.s32.totalorder %s11, 1
    %p161 = por %p159, %p160
    %p162 = scmp.ne.s32.totalorder %s154, %s157
    %p163 = scmp.eq.s32.totalorder %s11, 0
    %p164 = por %p162, %p163
    %p165 = scmp.ne.s32.totalorder %s154, %s157
    %p166 = scmp.eq.s32.totalorder %s16, 1
    %p167 = por %p165, %p166
    %p168 = scmp.ne.s32.totalorder %s157, %s158
    %p169 = scmp.eq.s32.totalorder %s16, 0
    %p170 = por %p168, %p169
    %p171 = scmp.ne.s32.totalorder %s157, %s158
    %p172 = scmp.eq.s32.totalorder %s17, 1
    %p173 = por %p171, %p172
    %p175 = scmp.ne.s32.totalorder %s158, %s174
    %p176 = scmp.eq.s32.totalorder %s17, 0
    %p177 = por %p175, %p176
    %p178 = scmp.le.s32.totalorder 1, %s11
    %p179 = scmp.lt.s32.totalorder %s11, 3
    %p180 = pnand %p178, %p179
    %p181 = pneg %p180
    // Predicated region
    $region9: #{conv_bn_act.2} parent=5 // pred_check
      _
    $region10: #{conv_bn_act.2} parent=5 // pred_check_branch
      %183 = sbr.rel (%p180) target = $region12
    $region11: #{conv_bn_act.2} parent=5 // pred_region
      %s184 = ssub.s32 %s11, 1
      // Predicated region
      $region13: #{conv_bn_act.2} parent=11 // pred_check
        %p185 = pneg %p86
      $region14: #{conv_bn_act.2} parent=11 // pred_check_branch
        %187 = sbr.rel (%p185) target = $region16
      $region15: #{conv_bn_act.2} parent=11 // pred_region
        %s188 = smul.u32 32, %s23
        %p189 = scmp.lt.s32.totalorder %s188, 31
        %s190 = scalar_select %p189, %s188, 31
        %p191 = scmp.lt.s32.totalorder %s22, 0
        %s192 = scalar_select %p191, %s22, 0
        %s193 = sadd.s32 %s192, %s190
        %s194 = smul.addr %s193, 4
        %s195 = scalar_lea.vmem %s1, %s194
        %s196 = smul.u32 32, %s23
      $region16: #{conv_bn_act.2} parent=11 // pred_fallthru
        _
    $region12: #{conv_bn_act.2} parent=5 // pred_fallthru
      _
    %p197 = scmp.lt.s32.totalorder %s11, 2
    // Predicated region
    $region17: #{conv_bn_act.2} parent=5 // pred_check
      %p198 = pneg %p197
    $region18: #{conv_bn_act.2} parent=5 // pred_check_branch
      %200 = sbr.rel (%p198) target = $region20
    $region19: #{conv_bn_act.2} parent=5 // pred_region
      // Predicated region
      $region21: #{conv_bn_act.2} parent=19 // pred_check
        %p201 = pneg %p52
      $region22: #{conv_bn_act.2} parent=19 // pred_check_branch
        %203 = sbr.rel (%p201) target = $region24
      $region23: #{conv_bn_act.2} parent=19 // pred_region
        %s204 = smul.u32 32, %s18
        %s205 = smul.u32 2, %s20
        %p206 = scmp.lt.s32.totalorder %s204, 63
        %s207 = scalar_select %p206, %s204, 63
        %p208 = scmp.lt.s32.totalorder %s205, 1
        %s209 = scalar_select %p208, %s205, 1
        %s210 = smul.addr %s207, 2
        %s211 = sadd.s32 %s209, %s210
        %s212 = smul.addr %s211, 4
        %s213 = scalar_lea.vmem %s0, %s212
        %s214 = smul.u32 32, %s18
        %s215 = smul.u32 2, %s20
      $region24: #{conv_bn_act.2} parent=19 // pred_fallthru
        _
    $region20: #{conv_bn_act.2} parent=5 // pred_fallthru
      _
    %p216 = scmp.le.s32.totalorder 1, %s11
    %p217 = scmp.lt.s32.totalorder %s11, 3
    %p218 = pnand %p216, %p217
    %p219 = pneg %p218
    // Predicated region
    $region25: #{conv_bn_act.2} parent=5 // pred_check
      _
    $region26: #{conv_bn_act.2} parent=5 // pred_check_branch
      %221 = sbr.rel (%p218) target = $region28
    $region27: #{conv_bn_act.2} parent=5 // pred_region
      %s222 = ssub.s32 %s11, 1
      %s223 = smul.u32 32, %s21
      %s224 = smul.u32 2, %s23
      %p225 = scmp.lt.s32.totalorder %s223, 63
      %s226 = scalar_select %p225, %s223, 63
      %p227 = scmp.lt.s32.totalorder %s224, 1
      %s228 = scalar_select %p227, %s224, 1
      %s229 = smul.addr %s226, 2
      %s230 = sadd.s32 %s228, %s229
      %s231 = smul.addr %s230, 4
      %s232 = scalar_lea.vmem %s0, %s231
      %p233 = pneg %p58
      %p234 = pneg %p55
      %s235 = smul.u32 32, %s23
      %p236 = scmp.lt.s32.totalorder %s235, 31
      %s237 = scalar_select %p236, %s235, 31
      %p238 = scmp.lt.s32.totalorder %s22, 0
      %s239 = scalar_select %p238, %s22, 0
      %s240 = sadd.s32 %s239, %s237
      %s241 = smul.addr %s240, 4
      %s242 = scalar_lea.vmem %s1, %s241
      %p243 = pneg %p86
      %p244 = pneg %p83
      %p245 = pneg %p114
      %p246 = pneg %p111
      %s247 = smul.u32 32, %s21
      %p248 = scmp.lt.s32.totalorder %s247, 63
      %s249 = scalar_select %p248, %s247, 63
      %p250 = scmp.lt.s32.totalorder %s22, 0
      %s251 = scalar_select %p250, %s22, 0
      %s252 = sadd.s32 %s251, %s249
      %s253 = smul.addr %s252, 4
      %s254 = scalar_lea.vmem %s2, %s253
      %p255 = pneg %p142
      %p256 = pneg %p139
      %p257 = scmp.lt.s32.totalorder %s21, 1
      %s258 = scalar_select %p257, %s21, 1
      %p259 = scmp.lt.s32.totalorder %s22, 0
      %s260 = scalar_select %p259, %s22, 0
      %s261 = sadd.s32 %s260, %s258
      %s262 = smul.addr %s261, 8
      %s263 = scalar_lea.vmem %s3, %s262
      %p264 = pneg %p170
      %p265 = pneg %p167
      %p266 = scmp.lt.s32.totalorder %s21, 1
      %s267 = scalar_select %p266, %s21, 1
      %p268 = scmp.lt.s32.totalorder %s22, 0
      %s269 = scalar_select %p268, %s22, 0
      %s270 = sadd.s32 %s269, %s267
      %s271 = smul.addr %s270, 8
      %s272 = scalar_lea.vmem %s4, %s271
      %s273 = smul.u32 32, %s21
      %s274 = smul.u32 2, %s23
      %p275 = scmp.lt.s32.totalorder %s273, 63
      %s276 = scalar_select %p275, %s273, 63
      %p277 = scmp.lt.s32.totalorder %s274, 1
      %s278 = scalar_select %p277, %s274, 1
      %s279 = smul.addr %s276, 2
      %s280 = sadd.s32 %s278, %s279
      %s281 = smul.addr %s280, 4
      %s282 = scalar_lea.vmem %s0, %s281
      %s283 = smul.u32 32, %s21
      %s284 = smul.u32 2, %s23
      %s285 = smul.u32 32, %s23
      %p286 = scmp.lt.s32.totalorder %s285, 31
      %s287 = scalar_select %p286, %s285, 31
      %p288 = scmp.lt.s32.totalorder %s22, 0
      %s289 = scalar_select %p288, %s22, 0
      %s290 = sadd.s32 %s289, %s287
      %s291 = smul.addr %s290, 4
      %s292 = scalar_lea.vmem %s1, %s291
      %s293 = smul.u32 32, %s23
      %s294 = smul.u32 32, %s21
      %p295 = scmp.lt.s32.totalorder %s294, 63
      %s296 = scalar_select %p295, %s294, 63
      %p297 = scmp.lt.s32.totalorder %s22, 0
      %s298 = scalar_select %p297, %s22, 0
      %s299 = sadd.s32 %s298, %s296
      %s300 = smul.addr %s299, 4
      %s301 = scalar_lea.vmem %s2, %s300
      %s302 = smul.u32 32, %s21
      %p303 = scmp.lt.s32.totalorder %s21, 1
      %s304 = scalar_select %p303, %s21, 1
      %p305 = scmp.lt.s32.totalorder %s22, 0
      %s306 = scalar_select %p305, %s22, 0
      %s307 = sadd.s32 %s306, %s304
      %s308 = smul.addr %s307, 8
      %s309 = scalar_lea.vmem %s3, %s308
      %p310 = scmp.lt.s32.totalorder %s21, 1
      %s311 = scalar_select %p310, %s21, 1
      %p312 = scmp.lt.s32.totalorder %s22, 0
      %s313 = scalar_select %p312, %s22, 0
      %s314 = sadd.s32 %s313, %s311
      %s315 = smul.addr %s314, 8
      %s316 = scalar_lea.vmem %s4, %s315
      %p318 = scmp.eq.s32.totalorder %s23, 0
      // Predicated region
      $region29: #{conv_bn_act.2} parent=27 // pred_check
        %p319 = pneg %p318
      $region30: #{conv_bn_act.2} parent=27 // pred_check_branch
        %321 = sbr.rel (%p319) target = $region32
      $region31: #{conv_bn_act.2} parent=27 // pred_region
        %322 = vst [vmem:[#allocation2] sm:$0xff] 0.0
        %323 = vst [vmem:[#allocation2 + $0x8] sm:$0xff] 0.0
        %324 = vst [vmem:[#allocation2 + $0x10] sm:$0xff] 0.0
        %325 = vst [vmem:[#allocation2 + $0x18] sm:$0xff] 0.0
        %326 = vst [vmem:[#allocation2 + $0x20] sm:$0xff] 0.0
        %327 = vst [vmem:[#allocation2 + $0x28] sm:$0xff] 0.0
        %328 = vst [vmem:[#allocation2 + $0x30] sm:$0xff] 0.0
        %329 = vst [vmem:[#allocation2 + $0x38] sm:$0xff] 0.0
        %330 = vst [vmem:[#allocation2 + $0x40] sm:$0xff] 0.0
        %331 = vst [vmem:[#allocation2 + $0x48] sm:$0xff] 0.0
        %332 = vst [vmem:[#allocation2 + $0x50] sm:$0xff] 0.0
        %333 = vst [vmem:[#allocation2 + $0x58] sm:$0xff] 0.0
        %334 = vst [vmem:[#allocation2 + $0x60] sm:$0xff] 0.0
        %335 = vst [vmem:[#allocation2 + $0x68] sm:$0xff] 0.0
        %336 = vst [vmem:[#allocation2 + $0x70] sm:$0xff] 0.0
        %337 = vst [vmem:[#allocation2 + $0x78] sm:$0xff] 0.0
        %338 = vst [vmem:[#allocation2 + $0x80] sm:$0xff] 0.0
        %339 = vst [vmem:[#allocation2 + $0x88] sm:$0xff] 0.0
        %340 = vst [vmem:[#allocation2 + $0x90] sm:$0xff] 0.0
        %341 = vst [vmem:[#allocation2 + $0x98] sm:$0xff] 0.0
        %342 = vst [vmem:[#allocation2 + $0xa0] sm:$0xff] 0.0
        %343 = vst [vmem:[#allocation2 + $0xa8] sm:$0xff] 0.0
        %344 = vst [vmem:[#allocation2 + $0xb0] sm:$0xff] 0.0
        %345 = vst [vmem:[#allocation2 + $0xb8] sm:$0xff] 0.0
        %346 = vst [vmem:[#allocation2 + $0xc0] sm:$0xff] 0.0
        %347 = vst [vmem:[#allocation2 + $0xc8] sm:$0xff] 0.0
        %348 = vst [vmem:[#allocation2 + $0xd0] sm:$0xff] 0.0
        %349 = vst [vmem:[#allocation2 + $0xd8] sm:$0xff] 0.0
        %350 = vst [vmem:[#allocation2 + $0xe0] sm:$0xff] 0.0
        %351 = vst [vmem:[#allocation2 + $0xe8] sm:$0xff] 0.0
        %352 = vst [vmem:[#allocation2 + $0xf0] sm:$0xff] 0.0
        %353 = vst [vmem:[#allocation2 + $0xf8] sm:$0xff] 0.0
      $region32: #{conv_bn_act.2} parent=27 // pred_fallthru
        _
      %v354 = vld [vmem:[#allocation2] sm:$0xff]
      %v355 = vld [vmem:[#allocation2 + $0x8] sm:$0xff]
      %v356 = vld [vmem:[#allocation2 + $0x10] sm:$0xff]
      %v357 = vld [vmem:[#allocation2 + $0x18] sm:$0xff]
      %v358 = vld [vmem:[#allocation2 + $0x20] sm:$0xff]
      %v359 = vld [vmem:[#allocation2 + $0x28] sm:$0xff]
      %v360 = vld [vmem:[#allocation2 + $0x30] sm:$0xff]
      %v361 = vld [vmem:[#allocation2 + $0x38] sm:$0xff]
      %v362 = vld [vmem:[#allocation2 + $0x40] sm:$0xff]
      %v363 = vld [vmem:[#allocation2 + $0x48] sm:$0xff]
      %v364 = vld [vmem:[#allocation2 + $0x50] sm:$0xff]
      %v365 = vld [vmem:[#allocation2 + $0x58] sm:$0xff]
      %v366 = vld [vmem:[#allocation2 + $0x60] sm:$0xff]
      %v367 = vld [vmem:[#allocation2 + $0x68] sm:$0xff]
      %v368 = vld [vmem:[#allocation2 + $0x70] sm:$0xff]
      %v369 = vld [vmem:[#allocation2 + $0x78] sm:$0xff]
      %v370 = vld [vmem:[#allocation2 + $0x80] sm:$0xff]
      %v371 = vld [vmem:[#allocation2 + $0x88] sm:$0xff]
      %v372 = vld [vmem:[#allocation2 + $0x90] sm:$0xff]
      %v373 = vld [vmem:[#allocation2 + $0x98] sm:$0xff]
      %v374 = vld [vmem:[#allocation2 + $0xa0] sm:$0xff]
      %v375 = vld [vmem:[#allocation2 + $0xa8] sm:$0xff]
      %v376 = vld [vmem:[#allocation2 + $0xb0] sm:$0xff]
      %v377 = vld [vmem:[#allocation2 + $0xb8] sm:$0xff]
      %v378 = vld [vmem:[#allocation2 + $0xc0] sm:$0xff]
      %v379 = vld [vmem:[#allocation2 + $0xc8] sm:$0xff]
      %v380 = vld [vmem:[#allocation2 + $0xd0] sm:$0xff]
      %v381 = vld [vmem:[#allocation2 + $0xd8] sm:$0xff]
      %v382 = vld [vmem:[#allocation2 + $0xe0] sm:$0xff]
      %v383 = vld [vmem:[#allocation2 + $0xe8] sm:$0xff]
      %v384 = vld [vmem:[#allocation2 + $0xf0] sm:$0xff]
      %v385 = vld [vmem:[#allocation2 + $0xf8] sm:$0xff]
      %v386 = vld [vmem:[%s282] sm:$0xff]
      %v387 = vld [vmem:[%s282 + $0x8] sm:$0xff]
      %v388 = vld [vmem:[%s282 + $0x10] sm:$0xff]
      %v389 = vld [vmem:[%s282 + $0x18] sm:$0xff]
      %v390 = vld [vmem:[%s282 + $0x20] sm:$0xff]
      %v391 = vld [vmem:[%s282 + $0x28] sm:$0xff]
      %v392 = vld [vmem:[%s282 + $0x30] sm:$0xff]
      %v393 = vld [vmem:[%s282 + $0x38] sm:$0xff]
      %v394 = vld [vmem:[%s282 + $0x40] sm:$0xff]
      %v395 = vld [vmem:[%s282 + $0x48] sm:$0xff]
      %v396 = vld [vmem:[%s282 + $0x50] sm:$0xff]
      %v397 = vld [vmem:[%s282 + $0x58] sm:$0xff]
      %v398 = vld [vmem:[%s282 + $0x60] sm:$0xff]
      %v399 = vld [vmem:[%s282 + $0x68] sm:$0xff]
      %v400 = vld [vmem:[%s282 + $0x70] sm:$0xff]
      %v401 = vld [vmem:[%s282 + $0x78] sm:$0xff]
      %v402 = vld [vmem:[%s282 + $0x80] sm:$0xff]
      %v403 = vld [vmem:[%s282 + $0x88] sm:$0xff]
      %v404 = vld [vmem:[%s282 + $0x90] sm:$0xff]
      %v405 = vld [vmem:[%s282 + $0x98] sm:$0xff]
      %v406 = vld [vmem:[%s282 + $0xa0] sm:$0xff]
      %v407 = vld [vmem:[%s282 + $0xa8] sm:$0xff]
      %v408 = vld [vmem:[%s282 + $0xb0] sm:$0xff]
      %v409 = vld [vmem:[%s282 + $0xb8] sm:$0xff]
      %v410 = vld [vmem:[%s282 + $0xc0] sm:$0xff]
      %v411 = vld [vmem:[%s282 + $0xc8] sm:$0xff]
      %v412 = vld [vmem:[%s282 + $0xd0] sm:$0xff]
      %v413 = vld [vmem:[%s282 + $0xd8] sm:$0xff]
      %v414 = vld [vmem:[%s282 + $0xe0] sm:$0xff]
      %v415 = vld [vmem:[%s282 + $0xe8] sm:$0xff]
      %v416 = vld [vmem:[%s282 + $0xf0] sm:$0xff]
      %v417 = vld [vmem:[%s282 + $0xf8] sm:$0xff]
      %v418 = vld [vmem:[%s292] sm:$0xf]
      %v419 = vld [vmem:[%s292 + $0x4] sm:$0xf]
      %v420 = vld [vmem:[%s292 + $0x8] sm:$0xf]
      %v421 = vld [vmem:[%s292 + $0xc] sm:$0xf]
      %v422 = vld [vmem:[%s292 + $0x10] sm:$0xf]
      %v423 = vld [vmem:[%s292 + $0x14] sm:$0xf]
      %v424 = vld [vmem:[%s292 + $0x18] sm:$0xf]
      %v425 = vld [vmem:[%s292 + $0x1c] sm:$0xf]
      %v426 = vld [vmem:[%s292 + $0x20] sm:$0xf]
      %v427 = vld [vmem:[%s292 + $0x24] sm:$0xf]
      %v428 = vld [vmem:[%s292 + $0x28] sm:$0xf]
      %v429 = vld [vmem:[%s292 + $0x2c] sm:$0xf]
      %v430 = vld [vmem:[%s292 + $0x30] sm:$0xf]
      %v431 = vld [vmem:[%s292 + $0x34] sm:$0xf]
      %v432 = vld [vmem:[%s292 + $0x38] sm:$0xf]
      %v433 = vld [vmem:[%s292 + $0x3c] sm:$0xf]
      %v434 = vld [vmem:[%s292 + $0x40] sm:$0xf]
      %v435 = vld [vmem:[%s292 + $0x44] sm:$0xf]
      %v436 = vld [vmem:[%s292 + $0x48] sm:$0xf]
      %v437 = vld [vmem:[%s292 + $0x4c] sm:$0xf]
      %v438 = vld [vmem:[%s292 + $0x50] sm:$0xf]
      %v439 = vld [vmem:[%s292 + $0x54] sm:$0xf]
      %v440 = vld [vmem:[%s292 + $0x58] sm:$0xf]
      %v441 = vld [vmem:[%s292 + $0x5c] sm:$0xf]
      %v442 = vld [vmem:[%s292 + $0x60] sm:$0xf]
      %v443 = vld [vmem:[%s292 + $0x64] sm:$0xf]
      %v444 = vld [vmem:[%s292 + $0x68] sm:$0xf]
      %v445 = vld [vmem:[%s292 + $0x6c] sm:$0xf]
      %v446 = vld [vmem:[%s292 + $0x70] sm:$0xf]
      %v447 = vld [vmem:[%s292 + $0x74] sm:$0xf]
      %v448 = vld [vmem:[%s292 + $0x78] sm:$0xf]
      %v449 = vld [vmem:[%s292 + $0x7c] sm:$0xf]
      %v482 = vunpack.c.l.b16 %v386
      %v483 = vunpack.c.h.b16 %v386
      %v484 = vunpack.c.l.b16 %v387
      %v485 = vunpack.c.h.b16 %v387
      %v486 = vunpack.c.l.b16 %v388
      %v487 = vunpack.c.h.b16 %v388
      %v488 = vunpack.c.l.b16 %v389
      %v489 = vunpack.c.h.b16 %v389
      %v490 = vunpack.c.l.b16 %v390
      %v491 = vunpack.c.h.b16 %v390
      %v492 = vunpack.c.l.b16 %v391
      %v493 = vunpack.c.h.b16 %v391
      %v494 = vunpack.c.l.b16 %v392
      %v495 = vunpack.c.h.b16 %v392
      %v496 = vunpack.c.l.b16 %v393
      %v497 = vunpack.c.h.b16 %v393
      %v498 = vunpack.c.l.b16 %v394
      %v499 = vunpack.c.h.b16 %v394
      %v500 = vunpack.c.l.b16 %v395
      %v501 = vunpack.c.h.b16 %v395
      %v502 = vunpack.c.l.b16 %v396
      %v503 = vunpack.c.h.b16 %v396
      %v504 = vunpack.c.l.b16 %v397
      %v505 = vunpack.c.h.b16 %v397
      %v506 = vunpack.c.l.b16 %v398
      %v507 = vunpack.c.h.b16 %v398
      %v508 = vunpack.c.l.b16 %v399
      %v509 = vunpack.c.h.b16 %v399
      %v510 = vunpack.c.l.b16 %v400
      %v511 = vunpack.c.h.b16 %v400
      %v512 = vunpack.c.l.b16 %v401
      %v513 = vunpack.c.h.b16 %v401
      %v514 = vunpack.c.l.b16 %v402
      %v515 = vunpack.c.h.b16 %v402
      %v516 = vunpack.c.l.b16 %v403
      %v517 = vunpack.c.h.b16 %v403
      %v518 = vunpack.c.l.b16 %v404
      %v519 = vunpack.c.h.b16 %v404
      %v520 = vunpack.c.l.b16 %v405
      %v521 = vunpack.c.h.b16 %v405
      %v522 = vunpack.c.l.b16 %v406
      %v523 = vunpack.c.h.b16 %v406
      %v524 = vunpack.c.l.b16 %v407
      %v525 = vunpack.c.h.b16 %v407
      %v526 = vunpack.c.l.b16 %v408
      %v527 = vunpack.c.h.b16 %v408
      %v528 = vunpack.c.l.b16 %v409
      %v529 = vunpack.c.h.b16 %v409
      %v530 = vunpack.c.l.b16 %v410
      %v531 = vunpack.c.h.b16 %v410
      %v532 = vunpack.c.l.b16 %v411
      %v533 = vunpack.c.h.b16 %v411
      %v534 = vunpack.c.l.b16 %v412
      %v535 = vunpack.c.h.b16 %v412
      %v536 = vunpack.c.l.b16 %v413
      %v537 = vunpack.c.h.b16 %v413
      %v538 = vunpack.c.l.b16 %v414
      %v539 = vunpack.c.h.b16 %v414
      %v540 = vunpack.c.l.b16 %v415
      %v541 = vunpack.c.h.b16 %v415
      %v542 = vunpack.c.l.b16 %v416
      %v543 = vunpack.c.h.b16 %v416
      %v544 = vunpack.c.l.b16 %v417
      %v545 = vunpack.c.h.b16 %v417
      %v546 = vpack.c.b16 %v484, %v482
      %v547 = vpack.c.b16 %v485, %v483
      %v548 = vpack.c.b16 %v488, %v486
      %v549 = vpack.c.b16 %v489, %v487
      %v550 = vpack.c.b16 %v492, %v490
      %v551 = vpack.c.b16 %v493, %v491
      %v552 = vpack.c.b16 %v496, %v494
      %v553 = vpack.c.b16 %v497, %v495
      %v554 = vpack.c.b16 %v500, %v498
      %v555 = vpack.c.b16 %v501, %v499
      %v556 = vpack.c.b16 %v504, %v502
      %v557 = vpack.c.b16 %v505, %v503
      %v558 = vpack.c.b16 %v508, %v506
      %v559 = vpack.c.b16 %v509, %v507
      %v560 = vpack.c.b16 %v512, %v510
      %v561 = vpack.c.b16 %v513, %v511
      %v562 = vpack.c.b16 %v516, %v514
      %v563 = vpack.c.b16 %v517, %v515
      %v564 = vpack.c.b16 %v520, %v518
      %v565 = vpack.c.b16 %v521, %v519
      %v566 = vpack.c.b16 %v524, %v522
      %v567 = vpack.c.b16 %v525, %v523
      %v568 = vpack.c.b16 %v528, %v526
      %v569 = vpack.c.b16 %v529, %v527
      %v570 = vpack.c.b16 %v532, %v530
      %v571 = vpack.c.b16 %v533, %v531
      %v572 = vpack.c.b16 %v536, %v534
      %v573 = vpack.c.b16 %v537, %v535
      %v574 = vpack.c.b16 %v540, %v538
      %v575 = vpack.c.b16 %v541, %v539
      %v576 = vpack.c.b16 %v544, %v542
      %v577 = vpack.c.b16 %v545, %v543
      %v642 = vunpack.c.l.b16 %v418
      %v643 = vunpack.c.l.b16 %v419
      %v644 = vunpack.c.l.b16 %v420
      %v645 = vunpack.c.l.b16 %v421
      %v646 = vunpack.c.l.b16 %v422
      %v647 = vunpack.c.l.b16 %v423
      %v648 = vunpack.c.l.b16 %v424
      %v649 = vunpack.c.l.b16 %v425
      %v650 = vunpack.c.l.b16 %v426
      %v651 = vunpack.c.l.b16 %v427
      %v652 = vunpack.c.l.b16 %v428
      %v653 = vunpack.c.l.b16 %v429
      %v654 = vunpack.c.l.b16 %v430
      %v655 = vunpack.c.l.b16 %v431
      %v656 = vunpack.c.l.b16 %v432
      %v657 = vunpack.c.l.b16 %v433
      %v658 = vunpack.c.l.b16 %v434
      %v659 = vunpack.c.l.b16 %v435
      %v660 = vunpack.c.l.b16 %v436
      %v661 = vunpack.c.l.b16 %v437
      %v662 = vunpack.c.l.b16 %v438
      %v663 = vunpack.c.l.b16 %v439
      %v664 = vunpack.c.l.b16 %v440
      %v665 = vunpack.c.l.b16 %v441
      %v666 = vunpack.c.l.b16 %v442
      %v667 = vunpack.c.l.b16 %v443
      %v668 = vunpack.c.l.b16 %v444
      %v669 = vunpack.c.l.b16 %v445
      %v670 = vunpack.c.l.b16 %v446
      %v671 = vunpack.c.l.b16 %v447
      %v672 = vunpack.c.l.b16 %v448
      %v673 = vunpack.c.l.b16 %v449
      %v674 = vpack.c.b16 %v643, %v642
      %v675 = vpack.c.b16 %v645, %v644
      %v676 = vpack.c.b16 %v647, %v646
      %v677 = vpack.c.b16 %v649, %v648
      %v678 = vpack.c.b16 %v651, %v650
      %v679 = vpack.c.b16 %v653, %v652
      %v680 = vpack.c.b16 %v655, %v654
      %v681 = vpack.c.b16 %v657, %v656
      %v682 = vpack.c.b16 %v659, %v658
      %v683 = vpack.c.b16 %v661, %v660
      %v684 = vpack.c.b16 %v663, %v662
      %v685 = vpack.c.b16 %v665, %v664
      %v686 = vpack.c.b16 %v667, %v666
      %v687 = vpack.c.b16 %v669, %v668
      %v688 = vpack.c.b16 %v671, %v670
      %v689 = vpack.c.b16 %v673, %v672
      %706 = vmatprep.subr.bf16.mxu0 0
      %707 = vmatpush1.bf16.msra.mxu0 %v681
      %708 = vmatprep.subr.bf16.mxu0 0
      %709 = vmatpush1.bf16.msra.mxu0 %v680
      %710 = vmatprep.subr.bf16.mxu0 0
      %711 = vmatpush1.bf16.msra.mxu0 %v679
      %712 = vmatprep.subr.bf16.mxu0 0
      %713 = vmatpush1.bf16.msra.mxu0 %v678
      %714 = vmatprep.subr.bf16.mxu0 0
      %715 = vmatpush1.bf16.msra.mxu0 %v677
      %716 = vmatprep.subr.bf16.mxu0 0
      %717 = vmatpush1.bf16.msra.mxu0 %v676
      %718 = vmatprep.subr.bf16.mxu0 0
      %719 = vmatpush1.bf16.msra.mxu0 %v675
      %720 = vmatprep.subr.bf16.mxu0 0
      %721 = vmatpush1.bf16.msra.mxu0 %v674
      %722 = vmatprep.subr.bf16.mxu0 0
      %723 = vmatpush2.bf16.msra.mxu0 %v689
      %724 = vmatprep.subr.bf16.mxu0 0
      %725 = vmatpush2.bf16.msra.mxu0 %v688
      %726 = vmatprep.subr.bf16.mxu0 0
      %727 = vmatpush2.bf16.msra.mxu0 %v687
      %728 = vmatprep.subr.bf16.mxu0 0
      %729 = vmatpush2.bf16.msra.mxu0 %v686
      %730 = vmatprep.subr.bf16.mxu0 0
      %731 = vmatpush2.bf16.msra.mxu0 %v685
      %732 = vmatprep.subr.bf16.mxu0 0
      %733 = vmatpush2.bf16.msra.mxu0 %v684
      %734 = vmatprep.subr.bf16.mxu0 0
      %735 = vmatpush2.bf16.msra.mxu0 %v683
      %736 = vmatprep.subr.bf16.mxu0 0
      %737 = vmatpush2.bf16.msra.mxu0 %v682
      %738 = vmatprep.mubr.bf16.mxu0 %v547
      %739 = vmatmul.mubr.bf16.gmra.mxu0 %v546
      %v740 = vpop.f32.mrf.mxu0
      %v741 = vadd.f32 0.0, %v740
      %v742 = vpop.f32.mrf.mxu0
      %v743 = vpop.f32.mrf.mxu0
      %v744 = vadd.f32 0.0, %v743
      %v745 = vpop.f32.mrf.mxu0
      %746 = vmatprep.mubr.bf16.mxu0 %v549
      %747 = vmatmul.mubr.bf16.gmra.mxu0 %v548
      %v748 = vpop.f32.mrf.mxu0
      %v749 = vadd.f32 0.0, %v748
      %v750 = vpop.f32.mrf.mxu0
      %v751 = vpop.f32.mrf.mxu0
      %v752 = vadd.f32 0.0, %v751
      %v753 = vpop.f32.mrf.mxu0
      %754 = vmatprep.mubr.bf16.mxu0 %v551
      %755 = vmatmul.mubr.bf16.gmra.mxu0 %v550
      %v756 = vpop.f32.mrf.mxu0
      %v757 = vadd.f32 0.0, %v756
      %v758 = vpop.f32.mrf.mxu0
      %v759 = vpop.f32.mrf.mxu0
      %v760 = vadd.f32 0.0, %v759
      %v761 = vpop.f32.mrf.mxu0
      %762 = vmatprep.mubr.bf16.mxu0 %v553
      %763 = vmatmul.mubr.bf16.gmra.mxu0 %v552
      %v764 = vpop.f32.mrf.mxu0
      %v765 = vadd.f32 0.0, %v764
      %v766 = vpop.f32.mrf.mxu0
      %v767 = vpop.f32.mrf.mxu0
      %v768 = vadd.f32 0.0, %v767
      %v769 = vpop.f32.mrf.mxu0
      %770 = vmatprep.mubr.bf16.mxu0 %v555
      %771 = vmatmul.mubr.bf16.gmra.mxu0 %v554
      %v772 = vpop.f32.mrf.mxu0
      %v773 = vadd.f32 0.0, %v772
      %v774 = vpop.f32.mrf.mxu0
      %v775 = vpop.f32.mrf.mxu0
      %v776 = vadd.f32 0.0, %v775
      %v777 = vpop.f32.mrf.mxu0
      %778 = vmatprep.mubr.bf16.mxu0 %v557
      %779 = vmatmul.mubr.bf16.gmra.mxu0 %v556
      %v780 = vpop.f32.mrf.mxu0
      %v781 = vadd.f32 0.0, %v780
      %v782 = vpop.f32.mrf.mxu0
      %v783 = vpop.f32.mrf.mxu0
      %v784 = vadd.f32 0.0, %v783
      %v785 = vpop.f32.mrf.mxu0
      %786 = vmatprep.mubr.bf16.mxu0 %v559
      %787 = vmatmul.mubr.bf16.gmra.mxu0 %v558
      %v788 = vpop.f32.mrf.mxu0
      %v789 = vadd.f32 0.0, %v788
      %v790 = vpop.f32.mrf.mxu0
      %v791 = vpop.f32.mrf.mxu0
      %v792 = vadd.f32 0.0, %v791
      %v793 = vpop.f32.mrf.mxu0
      %794 = vmatprep.mubr.bf16.mxu0 %v561
      %795 = vmatmul.mubr.bf16.gmra.mxu0 %v560
      %v796 = vpop.f32.mrf.mxu0
      %v797 = vadd.f32 0.0, %v796
      %v798 = vpop.f32.mrf.mxu0
      %v799 = vpop.f32.mrf.mxu0
      %v800 = vadd.f32 0.0, %v799
      %v801 = vpop.f32.mrf.mxu0
      %802 = vmatprep.mubr.bf16.mxu0 %v563
      %803 = vmatmul.mubr.bf16.gmra.mxu0 %v562
      %v804 = vpop.f32.mrf.mxu0
      %v805 = vadd.f32 0.0, %v804
      %v806 = vpop.f32.mrf.mxu0
      %v807 = vpop.f32.mrf.mxu0
      %v808 = vadd.f32 0.0, %v807
      %v809 = vpop.f32.mrf.mxu0
      %810 = vmatprep.mubr.bf16.mxu0 %v565
      %811 = vmatmul.mubr.bf16.gmra.mxu0 %v564
      %v812 = vpop.f32.mrf.mxu0
      %v813 = vadd.f32 0.0, %v812
      %v814 = vpop.f32.mrf.mxu0
      %v815 = vpop.f32.mrf.mxu0
      %v816 = vadd.f32 0.0, %v815
      %v817 = vpop.f32.mrf.mxu0
      %818 = vmatprep.mubr.bf16.mxu0 %v567
      %819 = vmatmul.mubr.bf16.gmra.mxu0 %v566
      %v820 = vpop.f32.mrf.mxu0
      %v821 = vadd.f32 0.0, %v820
      %v822 = vpop.f32.mrf.mxu0
      %v823 = vpop.f32.mrf.mxu0
      %v824 = vadd.f32 0.0, %v823
      %v825 = vpop.f32.mrf.mxu0
      %826 = vmatprep.mubr.bf16.mxu0 %v569
      %827 = vmatmul.mubr.bf16.gmra.mxu0 %v568
      %v828 = vpop.f32.mrf.mxu0
      %v829 = vadd.f32 0.0, %v828
      %v830 = vpop.f32.mrf.mxu0
      %v831 = vpop.f32.mrf.mxu0
      %v832 = vadd.f32 0.0, %v831
      %v833 = vpop.f32.mrf.mxu0
      %834 = vmatprep.mubr.bf16.mxu0 %v571
      %835 = vmatmul.mubr.bf16.gmra.mxu0 %v570
      %v836 = vpop.f32.mrf.mxu0
      %v837 = vadd.f32 0.0, %v836
      %v838 = vpop.f32.mrf.mxu0
      %v839 = vpop.f32.mrf.mxu0
      %v840 = vadd.f32 0.0, %v839
      %v841 = vpop.f32.mrf.mxu0
      %842 = vmatprep.mubr.bf16.mxu0 %v573
      %843 = vmatmul.mubr.bf16.gmra.mxu0 %v572
      %v844 = vpop.f32.mrf.mxu0
      %v845 = vadd.f32 0.0, %v844
      %v846 = vpop.f32.mrf.mxu0
      %v847 = vpop.f32.mrf.mxu0
      %v848 = vadd.f32 0.0, %v847
      %v849 = vpop.f32.mrf.mxu0
      %850 = vmatprep.mubr.bf16.mxu0 %v575
      %851 = vmatmul.mubr.bf16.gmra.mxu0 %v574
      %v852 = vpop.f32.mrf.mxu0
      %v853 = vadd.f32 0.0, %v852
      %v854 = vpop.f32.mrf.mxu0
      %v855 = vpop.f32.mrf.mxu0
      %v856 = vadd.f32 0.0, %v855
      %v857 = vpop.f32.mrf.mxu0
      %858 = vmatprep.mubr.bf16.mxu0 %v577
      %859 = vmatmul.mubr.bf16.gmra.mxu0 %v576
      %v860 = vpop.f32.mrf.mxu0
      %v861 = vadd.f32 0.0, %v860
      %v862 = vpop.f32.mrf.mxu0
      %v863 = vpop.f32.mrf.mxu0
      %v864 = vadd.f32 0.0, %v863
      %v865 = vpop.f32.mrf.mxu0
      %866 = vdwg.mxu0
      %v867 = vadd.f32 %v354, %v741
      %v868 = vadd.f32 %v355, %v744
      %v869 = vadd.f32 %v356, %v749
      %v870 = vadd.f32 %v357, %v752
      %v871 = vadd.f32 %v358, %v757
      %v872 = vadd.f32 %v359, %v760
      %v873 = vadd.f32 %v360, %v765
      %v874 = vadd.f32 %v361, %v768
      %v875 = vadd.f32 %v362, %v773
      %v876 = vadd.f32 %v363, %v776
      %v877 = vadd.f32 %v364, %v781
      %v878 = vadd.f32 %v365, %v784
      %v879 = vadd.f32 %v366, %v789
      %v880 = vadd.f32 %v367, %v792
      %v881 = vadd.f32 %v368, %v797
      %v882 = vadd.f32 %v369, %v800
      %v883 = vadd.f32 %v370, %v805
      %v884 = vadd.f32 %v371, %v808
      %v885 = vadd.f32 %v372, %v813
      %v886 = vadd.f32 %v373, %v816
      %v887 = vadd.f32 %v374, %v821
      %v888 = vadd.f32 %v375, %v824
      %v889 = vadd.f32 %v376, %v829
      %v890 = vadd.f32 %v377, %v832
      %v891 = vadd.f32 %v378, %v837
      %v892 = vadd.f32 %v379, %v840
      %v893 = vadd.f32 %v380, %v845
      %v894 = vadd.f32 %v381, %v848
      %v895 = vadd.f32 %v382, %v853
      %v896 = vadd.f32 %v383, %v856
      %v897 = vadd.f32 %v384, %v861
      %v898 = vadd.f32 %v385, %v864
      %899 = vst [vmem:[#allocation2] sm:$0xff] %v867
      %900 = vst [vmem:[#allocation2 + $0x8] sm:$0xff] %v868
      %901 = vst [vmem:[#allocation2 + $0x10] sm:$0xff] %v869
      %902 = vst [vmem:[#allocation2 + $0x18] sm:$0xff] %v870
      %903 = vst [vmem:[#allocation2 + $0x20] sm:$0xff] %v871
      %904 = vst [vmem:[#allocation2 + $0x28] sm:$0xff] %v872
      %905 = vst [vmem:[#allocation2 + $0x30] sm:$0xff] %v873
      %906 = vst [vmem:[#allocation2 + $0x38] sm:$0xff] %v874
      %907 = vst [vmem:[#allocation2 + $0x40] sm:$0xff] %v875
      %908 = vst [vmem:[#allocation2 + $0x48] sm:$0xff] %v876
      %909 = vst [vmem:[#allocation2 + $0x50] sm:$0xff] %v877
      %910 = vst [vmem:[#allocation2 + $0x58] sm:$0xff] %v878
      %911 = vst [vmem:[#allocation2 + $0x60] sm:$0xff] %v879
      %912 = vst [vmem:[#allocation2 + $0x68] sm:$0xff] %v880
      %913 = vst [vmem:[#allocation2 + $0x70] sm:$0xff] %v881
      %914 = vst [vmem:[#allocation2 + $0x78] sm:$0xff] %v882
      %915 = vst [vmem:[#allocation2 + $0x80] sm:$0xff] %v883
      %916 = vst [vmem:[#allocation2 + $0x88] sm:$0xff] %v884
      %917 = vst [vmem:[#allocation2 + $0x90] sm:$0xff] %v885
      %918 = vst [vmem:[#allocation2 + $0x98] sm:$0xff] %v886
      %919 = vst [vmem:[#allocation2 + $0xa0] sm:$0xff] %v887
      %920 = vst [vmem:[#allocation2 + $0xa8] sm:$0xff] %v888
      %921 = vst [vmem:[#allocation2 + $0xb0] sm:$0xff] %v889
      %922 = vst [vmem:[#allocation2 + $0xb8] sm:$0xff] %v890
      %923 = vst [vmem:[#allocation2 + $0xc0] sm:$0xff] %v891
      %924 = vst [vmem:[#allocation2 + $0xc8] sm:$0xff] %v892
      %925 = vst [vmem:[#allocation2 + $0xd0] sm:$0xff] %v893
      %926 = vst [vmem:[#allocation2 + $0xd8] sm:$0xff] %v894
      %927 = vst [vmem:[#allocation2 + $0xe0] sm:$0xff] %v895
      %928 = vst [vmem:[#allocation2 + $0xe8] sm:$0xff] %v896
      %929 = vst [vmem:[#allocation2 + $0xf0] sm:$0xff] %v897
      %930 = vst [vmem:[#allocation2 + $0xf8] sm:$0xff] %v898
      // Predicated region
      $region33: #{conv_bn_act.2} parent=27 // pred_check
        %p931 = pneg %p318
      $region34: #{conv_bn_act.2} parent=27 // pred_check_branch
        %933 = sbr.rel (%p931) target = $region36
      $region35: #{conv_bn_act.2} parent=27 // pred_region
        %v934 = vld [vmem:[#allocation2] sm:$0xff]
        %v935 = vld [vmem:[#allocation2 + $0x8] sm:$0xff]
        %v936 = vld [vmem:[#allocation2 + $0x10] sm:$0xff]
        %v937 = vld [vmem:[#allocation2 + $0x18] sm:$0xff]
        %v938 = vld [vmem:[#allocation2 + $0x20] sm:$0xff]
        %v939 = vld [vmem:[#allocation2 + $0x28] sm:$0xff]
        %v940 = vld [vmem:[#allocation2 + $0x30] sm:$0xff]
        %v941 = vld [vmem:[#allocation2 + $0x38] sm:$0xff]
        %v942 = vld [vmem:[#allocation2 + $0x40] sm:$0xff]
        %v943 = vld [vmem:[#allocation2 + $0x48] sm:$0xff]
        %v944 = vld [vmem:[#allocation2 + $0x50] sm:$0xff]
        %v945 = vld [vmem:[#allocation2 + $0x58] sm:$0xff]
        %v946 = vld [vmem:[#allocation2 + $0x60] sm:$0xff]
        %v947 = vld [vmem:[#allocation2 + $0x68] sm:$0xff]
        %v948 = vld [vmem:[#allocation2 + $0x70] sm:$0xff]
        %v949 = vld [vmem:[#allocation2 + $0x78] sm:$0xff]
        %v950 = vld [vmem:[#allocation2 + $0x80] sm:$0xff]
        %v951 = vld [vmem:[#allocation2 + $0x88] sm:$0xff]
        %v952 = vld [vmem:[#allocation2 + $0x90] sm:$0xff]
        %v953 = vld [vmem:[#allocation2 + $0x98] sm:$0xff]
        %v954 = vld [vmem:[#allocation2 + $0xa0] sm:$0xff]
        %v955 = vld [vmem:[#allocation2 + $0xa8] sm:$0xff]
        %v956 = vld [vmem:[#allocation2 + $0xb0] sm:$0xff]
        %v957 = vld [vmem:[#allocation2 + $0xb8] sm:$0xff]
        %v958 = vld [vmem:[#allocation2 + $0xc0] sm:$0xff]
        %v959 = vld [vmem:[#allocation2 + $0xc8] sm:$0xff]
        %v960 = vld [vmem:[#allocation2 + $0xd0] sm:$0xff]
        %v961 = vld [vmem:[#allocation2 + $0xd8] sm:$0xff]
        %v962 = vld [vmem:[#allocation2 + $0xe0] sm:$0xff]
        %v963 = vld [vmem:[#allocation2 + $0xe8] sm:$0xff]
        %v964 = vld [vmem:[#allocation2 + $0xf0] sm:$0xff]
        %v965 = vld [vmem:[#allocation2 + $0xf8] sm:$0xff]
        %v966 = vpack.c.bf16 %v935, %v934
        %v967 = vpack.c.bf16 %v937, %v936
        %v968 = vpack.c.bf16 %v939, %v938
        %v969 = vpack.c.bf16 %v941, %v940
        %v970 = vpack.c.bf16 %v943, %v942
        %v971 = vpack.c.bf16 %v945, %v944
        %v972 = vpack.c.bf16 %v947, %v946
        %v973 = vpack.c.bf16 %v949, %v948
        %v974 = vpack.c.bf16 %v951, %v950
        %v975 = vpack.c.bf16 %v953, %v952
        %v976 = vpack.c.bf16 %v955, %v954
        %v977 = vpack.c.bf16 %v957, %v956
        %v978 = vpack.c.bf16 %v959, %v958
        %v979 = vpack.c.bf16 %v961, %v960
        %v980 = vpack.c.bf16 %v963, %v962
        %v981 = vpack.c.bf16 %v965, %v964
        %v998 = vunpack.c.l.b16 %v966
        %v999 = vunpack.c.h.b16 %v966
        %v1000 = vunpack.c.l.b16 %v967
        %v1001 = vunpack.c.h.b16 %v967
        %v1002 = vunpack.c.l.b16 %v968
        %v1003 = vunpack.c.h.b16 %v968
        %v1004 = vunpack.c.l.b16 %v969
        %v1005 = vunpack.c.h.b16 %v969
        %v1006 = vunpack.c.l.b16 %v970
        %v1007 = vunpack.c.h.b16 %v970
        %v1008 = vunpack.c.l.b16 %v971
        %v1009 = vunpack.c.h.b16 %v971
        %v1010 = vunpack.c.l.b16 %v972
        %v1011 = vunpack.c.h.b16 %v972
        %v1012 = vunpack.c.l.b16 %v973
        %v1013 = vunpack.c.h.b16 %v973
        %v1014 = vunpack.c.l.b16 %v974
        %v1015 = vunpack.c.h.b16 %v974
        %v1016 = vunpack.c.l.b16 %v975
        %v1017 = vunpack.c.h.b16 %v975
        %v1018 = vunpack.c.l.b16 %v976
        %v1019 = vunpack.c.h.b16 %v976
        %v1020 = vunpack.c.l.b16 %v977
        %v1021 = vunpack.c.h.b16 %v977
        %v1022 = vunpack.c.l.b16 %v978
        %v1023 = vunpack.c.h.b16 %v978
        %v1024 = vunpack.c.l.b16 %v979
        %v1025 = vunpack.c.h.b16 %v979
        %v1026 = vunpack.c.l.b16 %v980
        %v1027 = vunpack.c.h.b16 %v980
        %v1028 = vunpack.c.l.b16 %v981
        %v1029 = vunpack.c.h.b16 %v981
        %v1030 = vpack.c.b16 %v998, %v998
        %v1031 = vpack.c.b16 %v999, %v999
        %v1032 = vpack.c.b16 %v1000, %v1000
        %v1033 = vpack.c.b16 %v1001, %v1001
        %v1034 = vpack.c.b16 %v1002, %v1002
        %v1035 = vpack.c.b16 %v1003, %v1003
        %v1036 = vpack.c.b16 %v1004, %v1004
        %v1037 = vpack.c.b16 %v1005, %v1005
        %v1038 = vpack.c.b16 %v1006, %v1006
        %v1039 = vpack.c.b16 %v1007, %v1007
        %v1040 = vpack.c.b16 %v1008, %v1008
        %v1041 = vpack.c.b16 %v1009, %v1009
        %v1042 = vpack.c.b16 %v1010, %v1010
        %v1043 = vpack.c.b16 %v1011, %v1011
        %v1044 = vpack.c.b16 %v1012, %v1012
        %v1045 = vpack.c.b16 %v1013, %v1013
        %v1046 = vpack.c.b16 %v1014, %v1014
        %v1047 = vpack.c.b16 %v1015, %v1015
        %v1048 = vpack.c.b16 %v1016, %v1016
        %v1049 = vpack.c.b16 %v1017, %v1017
        %v1050 = vpack.c.b16 %v1018, %v1018
        %v1051 = vpack.c.b16 %v1019, %v1019
        %v1052 = vpack.c.b16 %v1020, %v1020
        %v1053 = vpack.c.b16 %v1021, %v1021
        %v1054 = vpack.c.b16 %v1022, %v1022
        %v1055 = vpack.c.b16 %v1023, %v1023
        %v1056 = vpack.c.b16 %v1024, %v1024
        %v1057 = vpack.c.b16 %v1025, %v1025
        %v1058 = vpack.c.b16 %v1026, %v1026
        %v1059 = vpack.c.b16 %v1027, %v1027
        %v1060 = vpack.c.b16 %v1028, %v1028
        %v1061 = vpack.c.b16 %v1029, %v1029
        %1094 = vst [vmem:[%s301] sm:$0xf] %v1030
        %1095 = vst [vmem:[%s301 + $0x4] sm:$0xf] %v1031
        %1096 = vst [vmem:[%s301 + $0x8] sm:$0xf] %v1032
        %1097 = vst [vmem:[%s301 + $0xc] sm:$0xf] %v1033
        %1098 = vst [vmem:[%s301 + $0x10] sm:$0xf] %v1034
        %1099 = vst [vmem:[%s301 + $0x14] sm:$0xf] %v1035
        %1100 = vst [vmem:[%s301 + $0x18] sm:$0xf] %v1036
        %1101 = vst [vmem:[%s301 + $0x1c] sm:$0xf] %v1037
        %1102 = vst [vmem:[%s301 + $0x20] sm:$0xf] %v1038
        %1103 = vst [vmem:[%s301 + $0x24] sm:$0xf] %v1039
        %1104 = vst [vmem:[%s301 + $0x28] sm:$0xf] %v1040
        %1105 = vst [vmem:[%s301 + $0x2c] sm:$0xf] %v1041
        %1106 = vst [vmem:[%s301 + $0x30] sm:$0xf] %v1042
        %1107 = vst [vmem:[%s301 + $0x34] sm:$0xf] %v1043
        %1108 = vst [vmem:[%s301 + $0x38] sm:$0xf] %v1044
        %1109 = vst [vmem:[%s301 + $0x3c] sm:$0xf] %v1045
        %1110 = vst [vmem:[%s301 + $0x40] sm:$0xf] %v1046
        %1111 = vst [vmem:[%s301 + $0x44] sm:$0xf] %v1047
        %1112 = vst [vmem:[%s301 + $0x48] sm:$0xf] %v1048
        %1113 = vst [vmem:[%s301 + $0x4c] sm:$0xf] %v1049
        %1114 = vst [vmem:[%s301 + $0x50] sm:$0xf] %v1050
        %1115 = vst [vmem:[%s301 + $0x54] sm:$0xf] %v1051
        %1116 = vst [vmem:[%s301 + $0x58] sm:$0xf] %v1052
        %1117 = vst [vmem:[%s301 + $0x5c] sm:$0xf] %v1053
        %1118 = vst [vmem:[%s301 + $0x60] sm:$0xf] %v1054
        %1119 = vst [vmem:[%s301 + $0x64] sm:$0xf] %v1055
        %1120 = vst [vmem:[%s301 + $0x68] sm:$0xf] %v1056
        %1121 = vst [vmem:[%s301 + $0x6c] sm:$0xf] %v1057
        %1122 = vst [vmem:[%s301 + $0x70] sm:$0xf] %v1058
        %1123 = vst [vmem:[%s301 + $0x74] sm:$0xf] %v1059
        %1124 = vst [vmem:[%s301 + $0x78] sm:$0xf] %v1060
        %1125 = vst [vmem:[%s301 + $0x7c] sm:$0xf] %v1061
        %v1126 = vmul.f32 %v934, %v934
        %v1127 = vmul.f32 %v935, %v935
        %v1128 = vmul.f32 %v936, %v936
        %v1129 = vmul.f32 %v937, %v937
        %v1130 = vmul.f32 %v938, %v938
        %v1131 = vmul.f32 %v939, %v939
        %v1132 = vmul.f32 %v940, %v940
        %v1133 = vmul.f32 %v941, %v941
        %v1134 = vmul.f32 %v942, %v942
        %v1135 = vmul.f32 %v943, %v943
        %v1136 = vmul.f32 %v944, %v944
        %v1137 = vmul.f32 %v945, %v945
        %v1138 = vmul.f32 %v946, %v946
        %v1139 = vmul.f32 %v947, %v947
        %v1140 = vmul.f32 %v948, %v948
        %v1141 = vmul.f32 %v949, %v949
        %v1142 = vmul.f32 %v950, %v950
        %v1143 = vmul.f32 %v951, %v951
        %v1144 = vmul.f32 %v952, %v952
        %v1145 = vmul.f32 %v953, %v953
        %v1146 = vmul.f32 %v954, %v954
        %v1147 = vmul.f32 %v955, %v955
        %v1148 = vmul.f32 %v956, %v956
        %v1149 = vmul.f32 %v957, %v957
        %v1150 = vmul.f32 %v958, %v958
        %v1151 = vmul.f32 %v959, %v959
        %v1152 = vmul.f32 %v960, %v960
        %v1153 = vmul.f32 %v961, %v961
        %v1154 = vmul.f32 %v962, %v962
        %v1155 = vmul.f32 %v963, %v963
        %v1156 = vmul.f32 %v964, %v964
        %v1157 = vmul.f32 %v965, %v965
        %v1158 = vadd.f32 %v934, %v935
        %v1159 = vadd.f32 %v1126, %v1127
        %v1160 = vadd.f32 %v1158, %v936
        %v1161 = vadd.f32 %v1159, %v1128
        %v1162 = vadd.f32 %v1160, %v937
        %v1163 = vadd.f32 %v1161, %v1129
        %v1164 = vadd.f32 %v1162, %v938
        %v1165 = vadd.f32 %v1163, %v1130
        %v1166 = vadd.f32 %v1164, %v939
        %v1167 = vadd.f32 %v1165, %v1131
        %v1168 = vadd.f32 %v1166, %v940
        %v1169 = vadd.f32 %v1167, %v1132
        %v1170 = vadd.f32 %v1168, %v941
        %v1171 = vadd.f32 %v1169, %v1133
        %v1172 = vadd.f32 %v1170, %v942
        %v1173 = vadd.f32 %v1171, %v1134
        %v1174 = vadd.f32 %v1172, %v943
        %v1175 = vadd.f32 %v1173, %v1135
        %v1176 = vadd.f32 %v1174, %v944
        %v1177 = vadd.f32 %v1175, %v1136
        %v1178 = vadd.f32 %v1176, %v945
        %v1179 = vadd.f32 %v1177, %v1137
        %v1180 = vadd.f32 %v1178, %v946
        %v1181 = vadd.f32 %v1179, %v1138
        %v1182 = vadd.f32 %v1180, %v947
        %v1183 = vadd.f32 %v1181, %v1139
        %v1184 = vadd.f32 %v1182, %v948
        %v1185 = vadd.f32 %v1183, %v1140
        %v1186 = vadd.f32 %v1184, %v949
        %v1187 = vadd.f32 %v1185, %v1141
        %v1188 = vadd.f32 %v1186, %v950
        %v1189 = vadd.f32 %v1187, %v1142
        %v1190 = vadd.f32 %v1188, %v951
        %v1191 = vadd.f32 %v1189, %v1143
        %v1192 = vadd.f32 %v1190, %v952
        %v1193 = vadd.f32 %v1191, %v1144
        %v1194 = vadd.f32 %v1192, %v953
        %v1195 = vadd.f32 %v1193, %v1145
        %v1196 = vadd.f32 %v1194, %v954
        %v1197 = vadd.f32 %v1195, %v1146
        %v1198 = vadd.f32 %v1196, %v955
        %v1199 = vadd.f32 %v1197, %v1147
        %v1200 = vadd.f32 %v1198, %v956
        %v1201 = vadd.f32 %v1199, %v1148
        %v1202 = vadd.f32 %v1200, %v957
        %v1203 = vadd.f32 %v1201, %v1149
        %v1204 = vadd.f32 %v1202, %v958
        %v1205 = vadd.f32 %v1203, %v1150
        %v1206 = vadd.f32 %v1204, %v959
        %v1207 = vadd.f32 %v1205, %v1151
        %v1208 = vadd.f32 %v1206, %v960
        %v1209 = vadd.f32 %v1207, %v1152
        %v1210 = vadd.f32 %v1208, %v961
        %v1211 = vadd.f32 %v1209, %v1153
        %v1212 = vadd.f32 %v1210, %v962
        %v1213 = vadd.f32 %v1211, %v1154
        %v1214 = vadd.f32 %v1212, %v963
        %v1215 = vadd.f32 %v1213, %v1155
        %v1216 = vadd.f32 %v1214, %v964
        %v1217 = vadd.f32 %v1215, %v1156
        %v1218 = vadd.f32 %v1216, %v965
        %v1219 = vadd.f32 %v1217, %v1157
        %1220 = vst [vmem:[%s309] sm:$0xff] %v1218
        %1221 = vst [vmem:[%s316] sm:$0xff] %v1219
      $region36: #{conv_bn_act.2} parent=27 // pred_fallthru
        _
      %s1222 = smul.u32 32, %s21
      %p1223 = scmp.lt.s32.totalorder %s1222, 63
      %s1224 = scalar_select %p1223, %s1222, 63
      %p1225 = scmp.lt.s32.totalorder %s22, 0
      %s1226 = scalar_select %p1225, %s22, 0
      %s1227 = sadd.s32 %s1226, %s1224
      %s1228 = smul.addr %s1227, 4
      %s1229 = scalar_lea.vmem %s2, %s1228
      %p1230 = scmp.lt.s32.totalorder %s21, 1
      %s1231 = scalar_select %p1230, %s21, 1
      %p1232 = scmp.lt.s32.totalorder %s22, 0
      %s1233 = scalar_select %p1232, %s22, 0
      %s1234 = sadd.s32 %s1233, %s1231
      %s1235 = smul.addr %s1234, 8
      %s1236 = scalar_lea.vmem %s3, %s1235
      %p1237 = scmp.lt.s32.totalorder %s21, 1
      %s1238 = scalar_select %p1237, %s21, 1
      %p1239 = scmp.lt.s32.totalorder %s22, 0
      %s1240 = scalar_select %p1239, %s22, 0
      %s1241 = sadd.s32 %s1240, %s1238
      %s1242 = smul.addr %s1241, 8
      %s1243 = scalar_lea.vmem %s4, %s1242
      // Predicated region
      $region37: #{conv_bn_act.2} parent=27 // pred_check
        %p1244 = pneg %p111
      $region38: #{conv_bn_act.2} parent=27 // pred_check_branch
        %1246 = sbr.rel (%p1244) target = $region40
      $region39: #{conv_bn_act.2} parent=27 // pred_region
        %s1247 = smul.u32 32, %s21
      $region40: #{conv_bn_act.2} parent=27 // pred_fallthru
        _
      // Predicated region
      $region41: #{conv_bn_act.2} parent=27 // pred_check
        %p1248 = pneg %p139
      $region42: #{conv_bn_act.2} parent=27 // pred_check_branch
        %1250 = sbr.rel (%p1248) target = $region44
      $region43: #{conv_bn_act.2} parent=27 // pred_region
        _
      $region44: #{conv_bn_act.2} parent=27 // pred_fallthru
        _
      // Predicated region
      $region45: #{conv_bn_act.2} parent=27 // pred_check
        %p1251 = pneg %p167
      $region46: #{conv_bn_act.2} parent=27 // pred_check_branch
        %1253 = sbr.rel (%p1251) target = $region48
      $region47: #{conv_bn_act.2} parent=27 // pred_region
        _
      $region48: #{conv_bn_act.2} parent=27 // pred_fallthru
        _
    $region28: #{conv_bn_act.2} parent=5 // pred_fallthru
      _
    %p1254 = scmp.le.s32.totalorder 2, %s11
    // Predicated region
    $region49: #{conv_bn_act.2} parent=5 // pred_check
      %p1255 = pneg %p1254
    $region50: #{conv_bn_act.2} parent=5 // pred_check_branch
      %1257 = sbr.rel (%p1255) target = $region52
    $region51: #{conv_bn_act.2} parent=5 // pred_region
      %s1258 = ssub.s32 %s11, 2
      // Predicated region
      $region53: #{conv_bn_act.2} parent=51 // pred_check
        %p1259 = pneg %p117
      $region54: #{conv_bn_act.2} parent=51 // pred_check_branch
        %1261 = sbr.rel (%p1259) target = $region56
      $region55: #{conv_bn_act.2} parent=51 // pred_region
        %s1262 = smul.u32 32, %s24
        %p1263 = scmp.lt.s32.totalorder %s1262, 63
        %s1264 = scalar_select %p1263, %s1262, 63
        %p1265 = scmp.lt.s32.totalorder %s25, 0
        %s1266 = scalar_select %p1265, %s25, 0
        %s1267 = sadd.s32 %s1266, %s1264
        %s1268 = smul.addr %s1267, 4
        %s1269 = scalar_lea.vmem %s2, %s1268
      $region56: #{conv_bn_act.2} parent=51 // pred_fallthru
        _
      // Predicated region
      $region57: #{conv_bn_act.2} parent=51 // pred_check
        %p1270 = pneg %p145
      $region58: #{conv_bn_act.2} parent=51 // pred_check_branch
        %1272 = sbr.rel (%p1270) target = $region60
      $region59: #{conv_bn_act.2} parent=51 // pred_region
        %p1273 = scmp.lt.s32.totalorder %s24, 1
        %s1274 = scalar_select %p1273, %s24, 1
        %p1275 = scmp.lt.s32.totalorder %s25, 0
        %s1276 = scalar_select %p1275, %s25, 0
        %s1277 = sadd.s32 %s1276, %s1274
        %s1278 = smul.addr %s1277, 8
        %s1279 = scalar_lea.vmem %s3, %s1278
      $region60: #{conv_bn_act.2} parent=51 // pred_fallthru
        _
      // Predicated region
      $region61: #{conv_bn_act.2} parent=51 // pred_check
        %p1280 = pneg %p173
      $region62: #{conv_bn_act.2} parent=51 // pred_check_branch
        %1282 = sbr.rel (%p1280) target = $region64
      $region63: #{conv_bn_act.2} parent=51 // pred_region
        %p1283 = scmp.lt.s32.totalorder %s24, 1
        %s1284 = scalar_select %p1283, %s24, 1
        %p1285 = scmp.lt.s32.totalorder %s25, 0
        %s1286 = scalar_select %p1285, %s25, 0
        %s1287 = sadd.s32 %s1286, %s1284
        %s1288 = smul.addr %s1287, 8
        %s1289 = scalar_lea.vmem %s4, %s1288
      $region64: #{conv_bn_act.2} parent=51 // pred_fallthru
        _
    $region52: #{conv_bn_act.2} parent=5 // pred_fallthru
      _
  $region6: #{conv_bn_act.2} parent=0 // loop_footer
    %s15 = sadd.s32 1, %s11
  $region7: #{conv_bn_act.2} parent=0 // loop_footer_branch
    %10 = sbr.rel target = $region3
  $region8: #{conv_bn_act.2} parent=0 // loop_exit
    _

</llo_original>
